<compile_context>
chip_gen: v6e
topology: v6e:2x2x1
jax: 0.10.0
libtpu: 0.0.40
codegen_flags: <defaults>
</compile_context>

<pallas_src>
import jax
import jax.numpy as jnp
from jax.experimental import pallas as pl
from jax.experimental.pallas import tpu as pltpu

_EPS = 1e-5


def _round_up(x, m):
    return (x + m - 1) // m * m


# ------------------------------- Pallas kernel -------------------------------

def repmixer_block(x_nchw, fp):
    """x_nchw: (B, C, H, W) float32; fp: folded params from fold_params()."""
    B, C, H, W = x_nchw.shape
    HW = H * W
    LF = _round_up((H + 6) * W + 6, 128)   # flat zero-padded image + guards
    base = 3 * W + 3                       # flat offset of x[0, 0] in the scratch

    x_flat = x_nchw.reshape(B, C, HW)      # pure reshape, no transpose / pad

    # Column-validity masks for horizontal tap displacement dj = kw - 3
    # (the flat layout has no per-row column padding, so horizontally
    #  out-of-image taps must be masked out).
    col = jnp.arange(HW, dtype=jnp.int32) % W
    cmask = jnp.stack(
        [((col + (kw - 3) >= 0) & (col + (kw - 3) <= W - 1)).astype(jnp.float32)
         for kw in range(7)] + [jnp.ones((HW,), jnp.float32)], axis=0)  # (8, HW)

    def kernel(x_ref, cm_ref, w3_ref, al_ref, bl_ref, w7_ref, b7_ref,
               w1_ref, b1_ref, w2_ref, b2_ref, lsr_ref, lsb_ref,
               o_ref, sf_ref):
        xv = x_ref[0]                                  # (C, HW) -- single HBM read
        # Build the zero-padded image (flattened) in VMEM: 3 zero rows above and
        # below plus small guards at both ends; interior is x itself.
        sf_ref[...] = jnp.zeros_like(sf_ref)
        sf_ref[:, base:base + HW] = xv

        # Depthwise 7x7 (ConvFFN) and 3x3 (RepMixer) taps, fused: the 3x3 taps
        # reuse the windows already loaded for the central 3x3 of the 7x7.
        # Windows are 1-D lane-offset slices of the flat scratch -> cheap shifted
        # loads instead of 2-D tile-boundary-crossing window slices.
        acc7 = jnp.zeros((C, HW), jnp.float32)
        acc3 = jnp.zeros((C, HW), jnp.float32)
        for kw in range(7):
            use3 = 2 <= kw <= 4
            a7 = jnp.zeros((C, HW), jnp.float32)
            a3 = jnp.zeros((C, HW), jnp.float32) if use3 else None
            for kh in range(7):
                s = kh * W + kw
                win = sf_ref[:, s:s + HW]
                k7 = kh * 7 + kw
                a7 = a7 + w7_ref[:, k7:k7 + 1] * win
                if use3 and 2 <= kh <= 4:
                    t3 = (kh - 2) * 3 + (kw - 2)
                    a3 = a3 + w3_ref[:, t3:t3 + 1] * win
            if kw == 3:                                 # dj == 0 -> no mask needed
                acc7 = acc7 + a7
                acc3 = acc3 + a3
            else:
                m = cm_ref[kw:kw + 1, :]                # (1, HW) column mask
                acc7 = acc7 + a7 * m
                if use3:
                    acc3 = acc3 + a3 * m

        # RepMixer token mixing: x + ls_rm * (mixer(x) - norm(x))
        token = xv + lsr_ref[...] * (acc3 + al_ref[...] * xv + bl_ref[...])

        # ConvFFN: dw7(+BN) -> fc1 (1x1) -> ReLU -> fc2 (1x1); dropout p=0.
        # 1x1 convs are matmuls on (C, HW); bf16 MXU inputs, f32 accumulation.
        h = (acc7 + b7_ref[...]).astype(jnp.bfloat16)
        y1 = jnp.dot(w1_ref[...], h, preferred_element_type=jnp.float32) + b1_ref[...]
        y1 = jnp.maximum(y1, 0.0).astype(jnp.bfloat16)
        y2 = jnp.dot(w2_ref[...], y1, preferred_element_type=jnp.float32) + b2_ref[...]

        o_ref[0] = token + lsb_ref[...] * y2            # lane-dense (C, HW) store

    def full(arr):
        shp = arr.shape
        return pl.BlockSpec(shp, lambda b: (0,) * len(shp))

    grid_spec = pltpu.PrefetchScalarGridSpec(
        num_scalar_prefetch=0,
        grid=(B,),
        in_specs=[
            pl.BlockSpec((1, C, HW), lambda b: (b, 0, 0)),
            full(cmask), full(fp['w3f']), full(fp['a_lin']), full(fp['b_lin']),
            full(fp['w7f']), full(fp['b7']),
            full(fp['w1']), full(fp['b1']), full(fp['w2']), full(fp['b2']),
            full(fp['ls_rm']), full(fp['ls_blk']),
        ],
        out_specs=pl.BlockSpec((1, C, HW), lambda b: (b, 0, 0)),
        scratch_shapes=[pltpu.VMEM((C, LF), jnp.float32)],
    )
    out_flat = pl.pallas_call(
        kernel,
        out_shape=jax.ShapeDtypeStruct((B, C, HW), jnp.float32),
        grid_spec=grid_spec,
        compiler_params=pltpu.CompilerParams(
            dimension_semantics=("parallel",),          # batch axis -> v7x 2 TCs
            vmem_limit_bytes=48 * 1024 * 1024),
    )(x_flat, cmask, fp['w3f'], fp['a_lin'], fp['b_lin'],
      fp['w7f'], fp['b7'], fp['w1'], fp['b1'], fp['w2'], fp['b2'],
      fp['ls_rm'], fp['ls_blk'])
    return out_flat.reshape(B, C, H, W)


# ----------------------- parameter construction (glue) -----------------------

def _bn_params(key, c):
    k1, k2, k3, k4 = jax.random.split(key, 4)
    return dict(
        gamma=1.0 + 0.1 * jax.random.normal(k1, (c,), jnp.float32),
        beta=0.1 * jax.random.normal(k2, (c,), jnp.float32),
        mean=0.1 * jax.random.normal(k3, (c,), jnp.float32),
        var=1.0 + 0.1 * jnp.abs(jax.random.normal(k4, (c,), jnp.float32)),
    )


def init_params(key, dim, hidden, ls_init=1e-5):
    ks = jax.random.split(key, 10)
    tn = lambda k, shape, std: std * jax.random.truncated_normal(k, -2.0, 2.0, shape, jnp.float32)
    p = {}
    # RepMixer.mixer = RepCNNBlock(dim, dim, 3, groups=dim): conv + scale + BN-skip
    p['w3'] = tn(ks[0], (dim, 1, 3, 3), 0.1)          # dw 3x3 conv weight (no bias)
    p['bn3'] = _bn_params(ks[1], dim)
    p['w1x1'] = tn(ks[2], (dim, 1, 1, 1), 0.1)        # scale branch dw 1x1 conv
    p['bn1x1'] = _bn_params(ks[3], dim)
    p['bn_skip_m'] = _bn_params(ks[4], dim)           # mixer identity BN
    # RepMixer.norm = RepCNNBlock(..., num_conv_branches=0, no scale) -> BN skip only
    p['bn_skip_n'] = _bn_params(ks[5], dim)
    # ConvFFN
    p['w7'] = tn(ks[6], (dim, 1, 7, 7), 0.02)         # dw 7x7 conv weight (no bias)
    p['bn7'] = _bn_params(ks[7], dim)
    p['fc1_w'] = tn(ks[8], (hidden, dim, 1, 1), 0.02)
    p['fc1_b'] = jnp.zeros((hidden,), jnp.float32)
    p['fc2_w'] = tn(ks[9], (dim, hidden, 1, 1), 0.02)
    p['fc2_b'] = jnp.zeros((dim,), jnp.float32)
    # layer scales
    p['ls_rm'] = ls_init * jnp.ones((dim,), jnp.float32)
    p['ls_blk'] = ls_init * jnp.ones((dim,), jnp.float32)
    return p


def fold_params(p):
    def bn_scale_shift(bn):
        std = jnp.sqrt(bn['var'] + _EPS)
        g = bn['gamma'] / std
        b = bn['beta'] - bn['mean'] * g
        return g, b

    dim = p['w3'].shape[0]
    col = lambda v: v[:, None]                                   # (C,) -> (C, 1)
    g3, b3 = bn_scale_shift(p['bn3'])
    w3f = (p['w3'][:, 0] * g3[:, None, None]).reshape(dim, 9)    # (C, 9), idx kh*3+kw
    g1, bb1 = bn_scale_shift(p['bn1x1'])
    alpha1 = p['w1x1'][:, 0, 0, 0] * g1
    gm, bm = bn_scale_shift(p['bn_skip_m'])
    gn, bn_ = bn_scale_shift(p['bn_skip_n'])
    a_lin = alpha1 + gm - gn                 # coeff of x in (mixer(x) - norm(x))
    b_lin = b3 + bb1 + bm - bn_              # combined branch biases
    g7, b7 = bn_scale_shift(p['bn7'])
    w7f = (p['w7'][:, 0] * g7[:, None, None]).reshape(dim, 49)   # (C, 49), idx kh*7+kw
    return dict(
        w3f=w3f, a_lin=col(a_lin), b_lin=col(b_lin),
        w7f=w7f, b7=col(b7),
        w1=p['fc1_w'][:, :, 0, 0].astype(jnp.bfloat16),          # (Hd, C)
        b1=p['fc1_b'][:, None],                                  # (Hd, 1)
        w2=p['fc2_w'][:, :, 0, 0].astype(jnp.bfloat16),          # (C, Hd)
        b2=col(p['fc2_b']),
        ls_rm=col(p['ls_rm']), ls_blk=col(p['ls_blk']),
    )


# ------------------------------ pure-JAX reference ---------------------------

def reference_forward(x_nchw, p):
    def bn_apply(x, bn):
        std = jnp.sqrt(bn['var'] + _EPS)
        g = (bn['gamma'] / std).reshape(1, -1, 1, 1)
        b = (bn['beta'] - bn['mean'] * bn['gamma'] / std).reshape(1, -1, 1, 1)
        return x * g + b

    def dwconv(x, w, pad):
        return jax.lax.conv_general_dilated(
            x, w, (1, 1), [(pad, pad), (pad, pad)],
            feature_group_count=x.shape[1],
            dimension_numbers=('NCHW', 'OIHW', 'NCHW'))

    def pwconv(x, w, b):
        y = jax.lax.conv_general_dilated(
            x, w, (1, 1), 'VALID', dimension_numbers=('NCHW', 'OIHW', 'NCHW'))
        return y + b.reshape(1, -1, 1, 1)

    C = x_nchw.shape[1]
    norm_out = bn_apply(x_nchw, p['bn_skip_n'])
    mixer_out = (bn_apply(dwconv(x_nchw, p['w1x1'], 0), p['bn1x1'])
                 + bn_apply(x_nchw, p['bn_skip_m'])
                 + bn_apply(dwconv(x_nchw, p['w3'], 1), p['bn3']))
    token = x_nchw + p['ls_rm'].reshape(1, C, 1, 1) * (mixer_out - norm_out)
    h = bn_apply(dwconv(x_nchw, p['w7'], 3), p['bn7'])
    h = jax.nn.relu(pwconv(h, p['fc1_w'], p['fc1_b']))
    h = pwconv(h, p['fc2_w'], p['fc2_b'])
    return token + p['ls_blk'].reshape(1, C, 1, 1) * h


if __name__ == "__main__":
    key = jax.random.PRNGKey(0)
    kx, kp = jax.random.split(key)
    B, C, H, W = 2, 8, 16, 16
    mlp_ratio = 4.0
    hidden = int(C * mlp_ratio)

    x_nchw = jax.random.normal(kx, (B, C, H, W), jnp.float32)
    raw = init_params(kp, C, hidden)
    folded = fold_params(raw)

    out = repmixer_block(x_nchw, folded)
    jax.block_until_ready(out)

    ref = reference_forward(x_nchw, raw)
    err = float(jnp.max(jnp.abs(out - ref)))
    assert err < 1e-4, f"mismatch vs reference: {err}"
    print("KERNEL_OK")
</pallas_src>

<mosaic_0001>
module attributes {stable_mosaic.version = 11 : i64} {
  func.func @kernel(%arg0: i32, %arg1: memref<1x8x256xf32, #tpu.memory_space<vmem>>, %arg2: memref<8x256xf32, #tpu.memory_space<vmem>>, %arg3: memref<8x9xf32, #tpu.memory_space<vmem>>, %arg4: memref<8x1xf32, #tpu.memory_space<vmem>>, %arg5: memref<8x1xf32, #tpu.memory_space<vmem>>, %arg6: memref<8x49xf32, #tpu.memory_space<vmem>>, %arg7: memref<8x1xf32, #tpu.memory_space<vmem>>, %arg8: memref<32x8xbf16, #tpu.memory_space<vmem>>, %arg9: memref<32x1xf32, #tpu.memory_space<vmem>>, %arg10: memref<8x32xbf16, #tpu.memory_space<vmem>>, %arg11: memref<8x1xf32, #tpu.memory_space<vmem>>, %arg12: memref<8x1xf32, #tpu.memory_space<vmem>>, %arg13: memref<8x1xf32, #tpu.memory_space<vmem>>, %arg14: memref<1x8x256xf32, #tpu.memory_space<vmem>>, %arg15: memref<8x384xf32, #tpu.memory_space<vmem>>) attributes {dimension_semantics = [#tpu.dimension_semantics<parallel>], iteration_bounds = array<i64: 2>, scalar_prefetch = 0 : i64, scratch_operands = 1 : i64, tpu.core_type = #tpu.core_type<tc>, window_params = [{transform_indices = @transform_0, window_bounds = array<i64: 1, 8, 256>}, {pipeline_mode = #tpu.pipeline_mode<synchronous>, transform_indices = @transform_1, window_bounds = array<i64: 8, 256>}, {pipeline_mode = #tpu.pipeline_mode<synchronous>, transform_indices = @transform_2, window_bounds = array<i64: 8, 9>}, {pipeline_mode = #tpu.pipeline_mode<synchronous>, transform_indices = @transform_3, window_bounds = array<i64: 8, 1>}, {pipeline_mode = #tpu.pipeline_mode<synchronous>, transform_indices = @transform_4, window_bounds = array<i64: 8, 1>}, {pipeline_mode = #tpu.pipeline_mode<synchronous>, transform_indices = @transform_5, window_bounds = array<i64: 8, 49>}, {pipeline_mode = #tpu.pipeline_mode<synchronous>, transform_indices = @transform_6, window_bounds = array<i64: 8, 1>}, {pipeline_mode = #tpu.pipeline_mode<synchronous>, transform_indices = @transform_7, window_bounds = array<i64: 32, 8>}, {pipeline_mode = #tpu.pipeline_mode<synchronous>, transform_indices = @transform_8, window_bounds = array<i64: 32, 1>}, {pipeline_mode = #tpu.pipeline_mode<synchronous>, transform_indices = @transform_9, window_bounds = array<i64: 8, 32>}, {pipeline_mode = #tpu.pipeline_mode<synchronous>, transform_indices = @transform_10, window_bounds = array<i64: 8, 1>}, {pipeline_mode = #tpu.pipeline_mode<synchronous>, transform_indices = @transform_11, window_bounds = array<i64: 8, 1>}, {pipeline_mode = #tpu.pipeline_mode<synchronous>, transform_indices = @transform_12, window_bounds = array<i64: 8, 1>}, {transform_indices = @transform_13, window_bounds = array<i64: 1, 8, 256>}]} {
    %c0 = arith.constant 0 : index
    %c0_0 = arith.constant 0 : index
    %c0_1 = arith.constant 0 : index
    %0 = vector.load %arg1[%c0, %c0_0, %c0_1] : memref<1x8x256xf32, #tpu.memory_space<vmem>>, vector<1x8x256xf32>
    %1 = vector.shape_cast %0 : vector<1x8x256xf32> to vector<8x256xf32>
    %cst = arith.constant 0.000000e+00 : f32
    %2 = vector.broadcast %cst : f32 to vector<8x384xf32>
    %c0_2 = arith.constant 0 : index
    %c0_3 = arith.constant 0 : index
    %3 = vector.load %arg15[%c0_2, %c0_3] : memref<8x384xf32, #tpu.memory_space<vmem>>, vector<8x384xf32>
    tpu.vector_store %arg15[%c0_2, %c0_3], %2 {strides = array<i32>} : memref<8x384xf32, #tpu.memory_space<vmem>>, vector<8x384xf32>,
    %c0_4 = arith.constant 0 : index
    %c51 = arith.constant 51 : index
    %4 = vector.load %arg15[%c0_4, %c51] : memref<8x384xf32, #tpu.memory_space<vmem>>, vector<8x256xf32>
    tpu.vector_store %arg15[%c0_4, %c51], %1 {strides = array<i32>} : memref<8x384xf32, #tpu.memory_space<vmem>>, vector<8x256xf32>,
    %cst_5 = arith.constant 0.000000e+00 : f32
    %5 = vector.broadcast %cst_5 : f32 to vector<8x256xf32>
    %cst_6 = arith.constant 0.000000e+00 : f32
    %6 = vector.broadcast %cst_6 : f32 to vector<8x256xf32>
    %cst_7 = arith.constant 0.000000e+00 : f32
    %7 = vector.broadcast %cst_7 : f32 to vector<8x256xf32>
    %c0_8 = arith.constant 0 : index
    %c0_9 = arith.constant 0 : index
    %8 = vector.load %arg15[%c0_8, %c0_9] : memref<8x384xf32, #tpu.memory_space<vmem>>, vector<8x256xf32>
    %c0_10 = arith.constant 0 : index
    %c0_11 = arith.constant 0 : index
    %9 = vector.load %arg6[%c0_10, %c0_11] : memref<8x49xf32, #tpu.memory_space<vmem>>, vector<8x1xf32>
    %10 = vector.broadcast %9 : vector<8x1xf32> to vector<8x256xf32>
    %11 = arith.mulf %10, %8 : vector<8x256xf32>
    %12 = arith.addf %7, %11 : vector<8x256xf32>
    %c0_12 = arith.constant 0 : index
    %c16 = arith.constant 16 : index
    %13 = vector.load %arg15[%c0_12, %c16] : memref<8x384xf32, #tpu.memory_space<vmem>>, vector<8x256xf32>
    %c0_13 = arith.constant 0 : index
    %c7 = arith.constant 7 : index
    %14 = vector.load %arg6[%c0_13, %c7] : memref<8x49xf32, #tpu.memory_space<vmem>>, vector<8x1xf32>
    %15 = vector.broadcast %14 : vector<8x1xf32> to vector<8x256xf32>
    %16 = arith.mulf %15, %13 : vector<8x256xf32>
    %17 = arith.addf %12, %16 : vector<8x256xf32>
    %c0_14 = arith.constant 0 : index
    %c32 = arith.constant 32 : index
    %18 = vector.load %arg15[%c0_14, %c32] : memref<8x384xf32, #tpu.memory_space<vmem>>, vector<8x256xf32>
    %c0_15 = arith.constant 0 : index
    %c14 = arith.constant 14 : index
    %19 = vector.load %arg6[%c0_15, %c14] : memref<8x49xf32, #tpu.memory_space<vmem>>, vector<8x1xf32>
    %20 = vector.broadcast %19 : vector<8x1xf32> to vector<8x256xf32>
    %21 = arith.mulf %20, %18 : vector<8x256xf32>
    %22 = arith.addf %17, %21 : vector<8x256xf32>
    %c0_16 = arith.constant 0 : index
    %c48 = arith.constant 48 : index
    %23 = vector.load %arg15[%c0_16, %c48] : memref<8x384xf32, #tpu.memory_space<vmem>>, vector<8x256xf32>
    %c0_17 = arith.constant 0 : index
    %c21 = arith.constant 21 : index
    %24 = vector.load %arg6[%c0_17, %c21] : memref<8x49xf32, #tpu.memory_space<vmem>>, vector<8x1xf32>
    %25 = vector.broadcast %24 : vector<8x1xf32> to vector<8x256xf32>
    %26 = arith.mulf %25, %23 : vector<8x256xf32>
    %27 = arith.addf %22, %26 : vector<8x256xf32>
    %c0_18 = arith.constant 0 : index
    %c64 = arith.constant 64 : index
    %28 = vector.load %arg15[%c0_18, %c64] : memref<8x384xf32, #tpu.memory_space<vmem>>, vector<8x256xf32>
    %c0_19 = arith.constant 0 : index
    %c28 = arith.constant 28 : index
    %29 = vector.load %arg6[%c0_19, %c28] : memref<8x49xf32, #tpu.memory_space<vmem>>, vector<8x1xf32>
    %30 = vector.broadcast %29 : vector<8x1xf32> to vector<8x256xf32>
    %31 = arith.mulf %30, %28 : vector<8x256xf32>
    %32 = arith.addf %27, %31 : vector<8x256xf32>
    %c0_20 = arith.constant 0 : index
    %c80 = arith.constant 80 : index
    %33 = vector.load %arg15[%c0_20, %c80] : memref<8x384xf32, #tpu.memory_space<vmem>>, vector<8x256xf32>
    %c0_21 = arith.constant 0 : index
    %c35 = arith.constant 35 : index
    %34 = vector.load %arg6[%c0_21, %c35] : memref<8x49xf32, #tpu.memory_space<vmem>>, vector<8x1xf32>
    %35 = vector.broadcast %34 : vector<8x1xf32> to vector<8x256xf32>
    %36 = arith.mulf %35, %33 : vector<8x256xf32>
    %37 = arith.addf %32, %36 : vector<8x256xf32>
    %c0_22 = arith.constant 0 : index
    %c96 = arith.constant 96 : index
    %38 = vector.load %arg15[%c0_22, %c96] : memref<8x384xf32, #tpu.memory_space<vmem>>, vector<8x256xf32>
    %c0_23 = arith.constant 0 : index
    %c42 = arith.constant 42 : index
    %39 = vector.load %arg6[%c0_23, %c42] : memref<8x49xf32, #tpu.memory_space<vmem>>, vector<8x1xf32>
    %40 = vector.broadcast %39 : vector<8x1xf32> to vector<8x256xf32>
    %41 = arith.mulf %40, %38 : vector<8x256xf32>
    %42 = arith.addf %37, %41 : vector<8x256xf32>
    %c0_24 = arith.constant 0 : index
    %c0_25 = arith.constant 0 : index
    %43 = vector.load %arg2[%c0_24, %c0_25] : memref<8x256xf32, #tpu.memory_space<vmem>>, vector<1x256xf32>
    %44 = vector.broadcast %43 : vector<1x256xf32> to vector<8x256xf32>
    %45 = arith.mulf %42, %44 : vector<8x256xf32>
    %46 = arith.addf %5, %45 : vector<8x256xf32>
    %cst_26 = arith.constant 0.000000e+00 : f32
    %47 = vector.broadcast %cst_26 : f32 to vector<8x256xf32>
    %c0_27 = arith.constant 0 : index
    %c1 = arith.constant 1 : index
    %48 = vector.load %arg15[%c0_27, %c1] : memref<8x384xf32, #tpu.memory_space<vmem>>, vector<8x256xf32>
    %c0_28 = arith.constant 0 : index
    %c1_29 = arith.constant 1 : index
    %49 = vector.load %arg6[%c0_28, %c1_29] : memref<8x49xf32, #tpu.memory_space<vmem>>, vector<8x1xf32>
    %50 = vector.broadcast %49 : vector<8x1xf32> to vector<8x256xf32>
    %51 = arith.mulf %50, %48 : vector<8x256xf32>
    %52 = arith.addf %47, %51 : vector<8x256xf32>
    %c0_30 = arith.constant 0 : index
    %c17 = arith.constant 17 : index
    %53 = vector.load %arg15[%c0_30, %c17] : memref<8x384xf32, #tpu.memory_space<vmem>>, vector<8x256xf32>
    %c0_31 = arith.constant 0 : index
    %c8 = arith.constant 8 : index
    %54 = vector.load %arg6[%c0_31, %c8] : memref<8x49xf32, #tpu.memory_space<vmem>>, vector<8x1xf32>
    %55 = vector.broadcast %54 : vector<8x1xf32> to vector<8x256xf32>
    %56 = arith.mulf %55, %53 : vector<8x256xf32>
    %57 = arith.addf %52, %56 : vector<8x256xf32>
    %c0_32 = arith.constant 0 : index
    %c33 = arith.constant 33 : index
    %58 = vector.load %arg15[%c0_32, %c33] : memref<8x384xf32, #tpu.memory_space<vmem>>, vector<8x256xf32>
    %c0_33 = arith.constant 0 : index
    %c15 = arith.constant 15 : index
    %59 = vector.load %arg6[%c0_33, %c15] : memref<8x49xf32, #tpu.memory_space<vmem>>, vector<8x1xf32>
    %60 = vector.broadcast %59 : vector<8x1xf32> to vector<8x256xf32>
    %61 = arith.mulf %60, %58 : vector<8x256xf32>
    %62 = arith.addf %57, %61 : vector<8x256xf32>
    %c0_34 = arith.constant 0 : index
    %c49 = arith.constant 49 : index
    %63 = vector.load %arg15[%c0_34, %c49] : memref<8x384xf32, #tpu.memory_space<vmem>>, vector<8x256xf32>
    %c0_35 = arith.constant 0 : index
    %c22 = arith.constant 22 : index
    %64 = vector.load %arg6[%c0_35, %c22] : memref<8x49xf32, #tpu.memory_space<vmem>>, vector<8x1xf32>
    %65 = vector.broadcast %64 : vector<8x1xf32> to vector<8x256xf32>
    %66 = arith.mulf %65, %63 : vector<8x256xf32>
    %67 = arith.addf %62, %66 : vector<8x256xf32>
    %c0_36 = arith.constant 0 : index
    %c65 = arith.constant 65 : index
    %68 = vector.load %arg15[%c0_36, %c65] : memref<8x384xf32, #tpu.memory_space<vmem>>, vector<8x256xf32>
    %c0_37 = arith.constant 0 : index
    %c29 = arith.constant 29 : index
    %69 = vector.load %arg6[%c0_37, %c29] : memref<8x49xf32, #tpu.memory_space<vmem>>, vector<8x1xf32>
    %70 = vector.broadcast %69 : vector<8x1xf32> to vector<8x256xf32>
    %71 = arith.mulf %70, %68 : vector<8x256xf32>
    %72 = arith.addf %67, %71 : vector<8x256xf32>
    %c0_38 = arith.constant 0 : index
    %c81 = arith.constant 81 : index
    %73 = vector.load %arg15[%c0_38, %c81] : memref<8x384xf32, #tpu.memory_space<vmem>>, vector<8x256xf32>
    %c0_39 = arith.constant 0 : index
    %c36 = arith.constant 36 : index
    %74 = vector.load %arg6[%c0_39, %c36] : memref<8x49xf32, #tpu.memory_space<vmem>>, vector<8x1xf32>
    %75 = vector.broadcast %74 : vector<8x1xf32> to vector<8x256xf32>
    %76 = arith.mulf %75, %73 : vector<8x256xf32>
    %77 = arith.addf %72, %76 : vector<8x256xf32>
    %c0_40 = arith.constant 0 : index
    %c97 = arith.constant 97 : index
    %78 = vector.load %arg15[%c0_40, %c97] : memref<8x384xf32, #tpu.memory_space<vmem>>, vector<8x256xf32>
    %c0_41 = arith.constant 0 : index
    %c43 = arith.constant 43 : index
    %79 = vector.load %arg6[%c0_41, %c43] : memref<8x49xf32, #tpu.memory_space<vmem>>, vector<8x1xf32>
    %80 = vector.broadcast %79 : vector<8x1xf32> to vector<8x256xf32>
    %81 = arith.mulf %80, %78 : vector<8x256xf32>
    %82 = arith.addf %77, %81 : vector<8x256xf32>
    %c1_42 = arith.constant 1 : index
    %c0_43 = arith.constant 0 : index
    %83 = vector.load %arg2[%c1_42, %c0_43] : memref<8x256xf32, #tpu.memory_space<vmem>>, vector<1x256xf32>
    %84 = vector.broadcast %83 : vector<1x256xf32> to vector<8x256xf32>
    %85 = arith.mulf %82, %84 : vector<8x256xf32>
    %86 = arith.addf %46, %85 : vector<8x256xf32>
    %cst_44 = arith.constant 0.000000e+00 : f32
    %87 = vector.broadcast %cst_44 : f32 to vector<8x256xf32>
    %cst_45 = arith.constant 0.000000e+00 : f32
    %88 = vector.broadcast %cst_45 : f32 to vector<8x256xf32>
    %c0_46 = arith.constant 0 : index
    %c2 = arith.constant 2 : index
    %89 = vector.load %arg15[%c0_46, %c2] : memref<8x384xf32, #tpu.memory_space<vmem>>, vector<8x256xf32>
    %c0_47 = arith.constant 0 : index
    %c2_48 = arith.constant 2 : index
    %90 = vector.load %arg6[%c0_47, %c2_48] : memref<8x49xf32, #tpu.memory_space<vmem>>, vector<8x1xf32>
    %91 = vector.broadcast %90 : vector<8x1xf32> to vector<8x256xf32>
    %92 = arith.mulf %91, %89 : vector<8x256xf32>
    %93 = arith.addf %87, %92 : vector<8x256xf32>
    %c0_49 = arith.constant 0 : index
    %c18 = arith.constant 18 : index
    %94 = vector.load %arg15[%c0_49, %c18] : memref<8x384xf32, #tpu.memory_space<vmem>>, vector<8x256xf32>
    %c0_50 = arith.constant 0 : index
    %c9 = arith.constant 9 : index
    %95 = vector.load %arg6[%c0_50, %c9] : memref<8x49xf32, #tpu.memory_space<vmem>>, vector<8x1xf32>
    %96 = vector.broadcast %95 : vector<8x1xf32> to vector<8x256xf32>
    %97 = arith.mulf %96, %94 : vector<8x256xf32>
    %98 = arith.addf %93, %97 : vector<8x256xf32>
    %c0_51 = arith.constant 0 : index
    %c34 = arith.constant 34 : index
    %99 = vector.load %arg15[%c0_51, %c34] : memref<8x384xf32, #tpu.memory_space<vmem>>, vector<8x256xf32>
    %c0_52 = arith.constant 0 : index
    %c16_53 = arith.constant 16 : index
    %100 = vector.load %arg6[%c0_52, %c16_53] : memref<8x49xf32, #tpu.memory_space<vmem>>, vector<8x1xf32>
    %101 = vector.broadcast %100 : vector<8x1xf32> to vector<8x256xf32>
    %102 = arith.mulf %101, %99 : vector<8x256xf32>
    %103 = arith.addf %98, %102 : vector<8x256xf32>
    %c0_54 = arith.constant 0 : index
    %c0_55 = arith.constant 0 : index
    %104 = vector.load %arg3[%c0_54, %c0_55] : memref<8x9xf32, #tpu.memory_space<vmem>>, vector<8x1xf32>
    %105 = vector.broadcast %104 : vector<8x1xf32> to vector<8x256xf32>
    %106 = arith.mulf %105, %99 : vector<8x256xf32>
    %107 = arith.addf %88, %106 : vector<8x256xf32>
    %c0_56 = arith.constant 0 : index
    %c50 = arith.constant 50 : index
    %108 = vector.load %arg15[%c0_56, %c50] : memref<8x384xf32, #tpu.memory_space<vmem>>, vector<8x256xf32>
    %c0_57 = arith.constant 0 : index
    %c23 = arith.constant 23 : index
    %109 = vector.load %arg6[%c0_57, %c23] : memref<8x49xf32, #tpu.memory_space<vmem>>, vector<8x1xf32>
    %110 = vector.broadcast %109 : vector<8x1xf32> to vector<8x256xf32>
    %111 = arith.mulf %110, %108 : vector<8x256xf32>
    %112 = arith.addf %103, %111 : vector<8x256xf32>
    %c0_58 = arith.constant 0 : index
    %c3 = arith.constant 3 : index
    %113 = vector.load %arg3[%c0_58, %c3] : memref<8x9xf32, #tpu.memory_space<vmem>>, vector<8x1xf32>
    %114 = vector.broadcast %113 : vector<8x1xf32> to vector<8x256xf32>
    %115 = arith.mulf %114, %108 : vector<8x256xf32>
    %116 = arith.addf %107, %115 : vector<8x256xf32>
    %c0_59 = arith.constant 0 : index
    %c66 = arith.constant 66 : index
    %117 = vector.load %arg15[%c0_59, %c66] : memref<8x384xf32, #tpu.memory_space<vmem>>, vector<8x256xf32>
    %c0_60 = arith.constant 0 : index
    %c30 = arith.constant 30 : index
    %118 = vector.load %arg6[%c0_60, %c30] : memref<8x49xf32, #tpu.memory_space<vmem>>, vector<8x1xf32>
    %119 = vector.broadcast %118 : vector<8x1xf32> to vector<8x256xf32>
    %120 = arith.mulf %119, %117 : vector<8x256xf32>
    %121 = arith.addf %112, %120 : vector<8x256xf32>
    %c0_61 = arith.constant 0 : index
    %c6 = arith.constant 6 : index
    %122 = vector.load %arg3[%c0_61, %c6] : memref<8x9xf32, #tpu.memory_space<vmem>>, vector<8x1xf32>
    %123 = vector.broadcast %122 : vector<8x1xf32> to vector<8x256xf32>
    %124 = arith.mulf %123, %117 : vector<8x256xf32>
    %125 = arith.addf %116, %124 : vector<8x256xf32>
    %c0_62 = arith.constant 0 : index
    %c82 = arith.constant 82 : index
    %126 = vector.load %arg15[%c0_62, %c82] : memref<8x384xf32, #tpu.memory_space<vmem>>, vector<8x256xf32>
    %c0_63 = arith.constant 0 : index
    %c37 = arith.constant 37 : index
    %127 = vector.load %arg6[%c0_63, %c37] : memref<8x49xf32, #tpu.memory_space<vmem>>, vector<8x1xf32>
    %128 = vector.broadcast %127 : vector<8x1xf32> to vector<8x256xf32>
    %129 = arith.mulf %128, %126 : vector<8x256xf32>
    %130 = arith.addf %121, %129 : vector<8x256xf32>
    %c0_64 = arith.constant 0 : index
    %c98 = arith.constant 98 : index
    %131 = vector.load %arg15[%c0_64, %c98] : memref<8x384xf32, #tpu.memory_space<vmem>>, vector<8x256xf32>
    %c0_65 = arith.constant 0 : index
    %c44 = arith.constant 44 : index
    %132 = vector.load %arg6[%c0_65, %c44] : memref<8x49xf32, #tpu.memory_space<vmem>>, vector<8x1xf32>
    %133 = vector.broadcast %132 : vector<8x1xf32> to vector<8x256xf32>
    %134 = arith.mulf %133, %131 : vector<8x256xf32>
    %135 = arith.addf %130, %134 : vector<8x256xf32>
    %c2_66 = arith.constant 2 : index
    %c0_67 = arith.constant 0 : index
    %136 = vector.load %arg2[%c2_66, %c0_67] : memref<8x256xf32, #tpu.memory_space<vmem>>, vector<1x256xf32>
    %137 = vector.broadcast %136 : vector<1x256xf32> to vector<8x256xf32>
    %138 = arith.mulf %135, %137 : vector<8x256xf32>
    %139 = arith.addf %86, %138 : vector<8x256xf32>
    %140 = vector.broadcast %136 : vector<1x256xf32> to vector<8x256xf32>
    %141 = arith.mulf %125, %140 : vector<8x256xf32>
    %142 = arith.addf %6, %141 : vector<8x256xf32>
    %cst_68 = arith.constant 0.000000e+00 : f32
    %143 = vector.broadcast %cst_68 : f32 to vector<8x256xf32>
    %cst_69 = arith.constant 0.000000e+00 : f32
    %144 = vector.broadcast %cst_69 : f32 to vector<8x256xf32>
    %c0_70 = arith.constant 0 : index
    %c3_71 = arith.constant 3 : index
    %145 = vector.load %arg15[%c0_70, %c3_71] : memref<8x384xf32, #tpu.memory_space<vmem>>, vector<8x256xf32>
    %c0_72 = arith.constant 0 : index
    %c3_73 = arith.constant 3 : index
    %146 = vector.load %arg6[%c0_72, %c3_73] : memref<8x49xf32, #tpu.memory_space<vmem>>, vector<8x1xf32>
    %147 = vector.broadcast %146 : vector<8x1xf32> to vector<8x256xf32>
    %148 = arith.mulf %147, %145 : vector<8x256xf32>
    %149 = arith.addf %143, %148 : vector<8x256xf32>
    %c0_74 = arith.constant 0 : index
    %c19 = arith.constant 19 : index
    %150 = vector.load %arg15[%c0_74, %c19] : memref<8x384xf32, #tpu.memory_space<vmem>>, vector<8x256xf32>
    %c0_75 = arith.constant 0 : index
    %c10 = arith.constant 10 : index
    %151 = vector.load %arg6[%c0_75, %c10] : memref<8x49xf32, #tpu.memory_space<vmem>>, vector<8x1xf32>
    %152 = vector.broadcast %151 : vector<8x1xf32> to vector<8x256xf32>
    %153 = arith.mulf %152, %150 : vector<8x256xf32>
    %154 = arith.addf %149, %153 : vector<8x256xf32>
    %c0_76 = arith.constant 0 : index
    %c35_77 = arith.constant 35 : index
    %155 = vector.load %arg15[%c0_76, %c35_77] : memref<8x384xf32, #tpu.memory_space<vmem>>, vector<8x256xf32>
    %c0_78 = arith.constant 0 : index
    %c17_79 = arith.constant 17 : index
    %156 = vector.load %arg6[%c0_78, %c17_79] : memref<8x49xf32, #tpu.memory_space<vmem>>, vector<8x1xf32>
    %157 = vector.broadcast %156 : vector<8x1xf32> to vector<8x256xf32>
    %158 = arith.mulf %157, %155 : vector<8x256xf32>
    %159 = arith.addf %154, %158 : vector<8x256xf32>
    %c0_80 = arith.constant 0 : index
    %c1_81 = arith.constant 1 : index
    %160 = vector.load %arg3[%c0_80, %c1_81] : memref<8x9xf32, #tpu.memory_space<vmem>>, vector<8x1xf32>
    %161 = vector.broadcast %160 : vector<8x1xf32> to vector<8x256xf32>
    %162 = arith.mulf %161, %155 : vector<8x256xf32>
    %163 = arith.addf %144, %162 : vector<8x256xf32>
    %c0_82 = arith.constant 0 : index
    %c51_83 = arith.constant 51 : index
    %164 = vector.load %arg15[%c0_82, %c51_83] : memref<8x384xf32, #tpu.memory_space<vmem>>, vector<8x256xf32>
    %c0_84 = arith.constant 0 : index
    %c24 = arith.constant 24 : index
    %165 = vector.load %arg6[%c0_84, %c24] : memref<8x49xf32, #tpu.memory_space<vmem>>, vector<8x1xf32>
    %166 = vector.broadcast %165 : vector<8x1xf32> to vector<8x256xf32>
    %167 = arith.mulf %166, %164 : vector<8x256xf32>
    %168 = arith.addf %159, %167 : vector<8x256xf32>
    %c0_85 = arith.constant 0 : index
    %c4 = arith.constant 4 : index
    %169 = vector.load %arg3[%c0_85, %c4] : memref<8x9xf32, #tpu.memory_space<vmem>>, vector<8x1xf32>
    %170 = vector.broadcast %169 : vector<8x1xf32> to vector<8x256xf32>
    %171 = arith.mulf %170, %164 : vector<8x256xf32>
    %172 = arith.addf %163, %171 : vector<8x256xf32>
    %c0_86 = arith.constant 0 : index
    %c67 = arith.constant 67 : index
    %173 = vector.load %arg15[%c0_86, %c67] : memref<8x384xf32, #tpu.memory_space<vmem>>, vector<8x256xf32>
    %c0_87 = arith.constant 0 : index
    %c31 = arith.constant 31 : index
    %174 = vector.load %arg6[%c0_87, %c31] : memref<8x49xf32, #tpu.memory_space<vmem>>, vector<8x1xf32>
    %175 = vector.broadcast %174 : vector<8x1xf32> to vector<8x256xf32>
    %176 = arith.mulf %175, %173 : vector<8x256xf32>
    %177 = arith.addf %168, %176 : vector<8x256xf32>
    %c0_88 = arith.constant 0 : index
    %c7_89 = arith.constant 7 : index
    %178 = vector.load %arg3[%c0_88, %c7_89] : memref<8x9xf32, #tpu.memory_space<vmem>>, vector<8x1xf32>
    %179 = vector.broadcast %178 : vector<8x1xf32> to vector<8x256xf32>
    %180 = arith.mulf %179, %173 : vector<8x256xf32>
    %181 = arith.addf %172, %180 : vector<8x256xf32>
    %c0_90 = arith.constant 0 : index
    %c83 = arith.constant 83 : index
    %182 = vector.load %arg15[%c0_90, %c83] : memref<8x384xf32, #tpu.memory_space<vmem>>, vector<8x256xf32>
    %c0_91 = arith.constant 0 : index
    %c38 = arith.constant 38 : index
    %183 = vector.load %arg6[%c0_91, %c38] : memref<8x49xf32, #tpu.memory_space<vmem>>, vector<8x1xf32>
    %184 = vector.broadcast %183 : vector<8x1xf32> to vector<8x256xf32>
    %185 = arith.mulf %184, %182 : vector<8x256xf32>
    %186 = arith.addf %177, %185 : vector<8x256xf32>
    %c0_92 = arith.constant 0 : index
    %c99 = arith.constant 99 : index
    %187 = vector.load %arg15[%c0_92, %c99] : memref<8x384xf32, #tpu.memory_space<vmem>>, vector<8x256xf32>
    %c0_93 = arith.constant 0 : index
    %c45 = arith.constant 45 : index
    %188 = vector.load %arg6[%c0_93, %c45] : memref<8x49xf32, #tpu.memory_space<vmem>>, vector<8x1xf32>
    %189 = vector.broadcast %188 : vector<8x1xf32> to vector<8x256xf32>
    %190 = arith.mulf %189, %187 : vector<8x256xf32>
    %191 = arith.addf %186, %190 : vector<8x256xf32>
    %192 = arith.addf %139, %191 : vector<8x256xf32>
    %193 = arith.addf %142, %181 : vector<8x256xf32>
    %cst_94 = arith.constant 0.000000e+00 : f32
    %194 = vector.broadcast %cst_94 : f32 to vector<8x256xf32>
    %cst_95 = arith.constant 0.000000e+00 : f32
    %195 = vector.broadcast %cst_95 : f32 to vector<8x256xf32>
    %c0_96 = arith.constant 0 : index
    %c4_97 = arith.constant 4 : index
    %196 = vector.load %arg15[%c0_96, %c4_97] : memref<8x384xf32, #tpu.memory_space<vmem>>, vector<8x256xf32>
    %c0_98 = arith.constant 0 : index
    %c4_99 = arith.constant 4 : index
    %197 = vector.load %arg6[%c0_98, %c4_99] : memref<8x49xf32, #tpu.memory_space<vmem>>, vector<8x1xf32>
    %198 = vector.broadcast %197 : vector<8x1xf32> to vector<8x256xf32>
    %199 = arith.mulf %198, %196 : vector<8x256xf32>
    %200 = arith.addf %194, %199 : vector<8x256xf32>
    %c0_100 = arith.constant 0 : index
    %c20 = arith.constant 20 : index
    %201 = vector.load %arg15[%c0_100, %c20] : memref<8x384xf32, #tpu.memory_space<vmem>>, vector<8x256xf32>
    %c0_101 = arith.constant 0 : index
    %c11 = arith.constant 11 : index
    %202 = vector.load %arg6[%c0_101, %c11] : memref<8x49xf32, #tpu.memory_space<vmem>>, vector<8x1xf32>
    %203 = vector.broadcast %202 : vector<8x1xf32> to vector<8x256xf32>
    %204 = arith.mulf %203, %201 : vector<8x256xf32>
    %205 = arith.addf %200, %204 : vector<8x256xf32>
    %c0_102 = arith.constant 0 : index
    %c36_103 = arith.constant 36 : index
    %206 = vector.load %arg15[%c0_102, %c36_103] : memref<8x384xf32, #tpu.memory_space<vmem>>, vector<8x256xf32>
    %c0_104 = arith.constant 0 : index
    %c18_105 = arith.constant 18 : index
    %207 = vector.load %arg6[%c0_104, %c18_105] : memref<8x49xf32, #tpu.memory_space<vmem>>, vector<8x1xf32>
    %208 = vector.broadcast %207 : vector<8x1xf32> to vector<8x256xf32>
    %209 = arith.mulf %208, %206 : vector<8x256xf32>
    %210 = arith.addf %205, %209 : vector<8x256xf32>
    %c0_106 = arith.constant 0 : index
    %c2_107 = arith.constant 2 : index
    %211 = vector.load %arg3[%c0_106, %c2_107] : memref<8x9xf32, #tpu.memory_space<vmem>>, vector<8x1xf32>
    %212 = vector.broadcast %211 : vector<8x1xf32> to vector<8x256xf32>
    %213 = arith.mulf %212, %206 : vector<8x256xf32>
    %214 = arith.addf %195, %213 : vector<8x256xf32>
    %c0_108 = arith.constant 0 : index
    %c52 = arith.constant 52 : index
    %215 = vector.load %arg15[%c0_108, %c52] : memref<8x384xf32, #tpu.memory_space<vmem>>, vector<8x256xf32>
    %c0_109 = arith.constant 0 : index
    %c25 = arith.constant 25 : index
    %216 = vector.load %arg6[%c0_109, %c25] : memref<8x49xf32, #tpu.memory_space<vmem>>, vector<8x1xf32>
    %217 = vector.broadcast %216 : vector<8x1xf32> to vector<8x256xf32>
    %218 = arith.mulf %217, %215 : vector<8x256xf32>
    %219 = arith.addf %210, %218 : vector<8x256xf32>
    %c0_110 = arith.constant 0 : index
    %c5 = arith.constant 5 : index
    %220 = vector.load %arg3[%c0_110, %c5] : memref<8x9xf32, #tpu.memory_space<vmem>>, vector<8x1xf32>
    %221 = vector.broadcast %220 : vector<8x1xf32> to vector<8x256xf32>
    %222 = arith.mulf %221, %215 : vector<8x256xf32>
    %223 = arith.addf %214, %222 : vector<8x256xf32>
    %c0_111 = arith.constant 0 : index
    %c68 = arith.constant 68 : index
    %224 = vector.load %arg15[%c0_111, %c68] : memref<8x384xf32, #tpu.memory_space<vmem>>, vector<8x256xf32>
    %c0_112 = arith.constant 0 : index
    %c32_113 = arith.constant 32 : index
    %225 = vector.load %arg6[%c0_112, %c32_113] : memref<8x49xf32, #tpu.memory_space<vmem>>, vector<8x1xf32>
    %226 = vector.broadcast %225 : vector<8x1xf32> to vector<8x256xf32>
    %227 = arith.mulf %226, %224 : vector<8x256xf32>
    %228 = arith.addf %219, %227 : vector<8x256xf32>
    %c0_114 = arith.constant 0 : index
    %c8_115 = arith.constant 8 : index
    %229 = vector.load %arg3[%c0_114, %c8_115] : memref<8x9xf32, #tpu.memory_space<vmem>>, vector<8x1xf32>
    %230 = vector.broadcast %229 : vector<8x1xf32> to vector<8x256xf32>
    %231 = arith.mulf %230, %224 : vector<8x256xf32>
    %232 = arith.addf %223, %231 : vector<8x256xf32>
    %c0_116 = arith.constant 0 : index
    %c84 = arith.constant 84 : index
    %233 = vector.load %arg15[%c0_116, %c84] : memref<8x384xf32, #tpu.memory_space<vmem>>, vector<8x256xf32>
    %c0_117 = arith.constant 0 : index
    %c39 = arith.constant 39 : index
    %234 = vector.load %arg6[%c0_117, %c39] : memref<8x49xf32, #tpu.memory_space<vmem>>, vector<8x1xf32>
    %235 = vector.broadcast %234 : vector<8x1xf32> to vector<8x256xf32>
    %236 = arith.mulf %235, %233 : vector<8x256xf32>
    %237 = arith.addf %228, %236 : vector<8x256xf32>
    %c0_118 = arith.constant 0 : index
    %c100 = arith.constant 100 : index
    %238 = vector.load %arg15[%c0_118, %c100] : memref<8x384xf32, #tpu.memory_space<vmem>>, vector<8x256xf32>
    %c0_119 = arith.constant 0 : index
    %c46 = arith.constant 46 : index
    %239 = vector.load %arg6[%c0_119, %c46] : memref<8x49xf32, #tpu.memory_space<vmem>>, vector<8x1xf32>
    %240 = vector.broadcast %239 : vector<8x1xf32> to vector<8x256xf32>
    %241 = arith.mulf %240, %238 : vector<8x256xf32>
    %242 = arith.addf %237, %241 : vector<8x256xf32>
    %c4_120 = arith.constant 4 : index
    %c0_121 = arith.constant 0 : index
    %243 = vector.load %arg2[%c4_120, %c0_121] : memref<8x256xf32, #tpu.memory_space<vmem>>, vector<1x256xf32>
    %244 = vector.broadcast %243 : vector<1x256xf32> to vector<8x256xf32>
    %245 = arith.mulf %242, %244 : vector<8x256xf32>
    %246 = arith.addf %192, %245 : vector<8x256xf32>
    %247 = vector.broadcast %243 : vector<1x256xf32> to vector<8x256xf32>
    %248 = arith.mulf %232, %247 : vector<8x256xf32>
    %249 = arith.addf %193, %248 : vector<8x256xf32>
    %cst_122 = arith.constant 0.000000e+00 : f32
    %250 = vector.broadcast %cst_122 : f32 to vector<8x256xf32>
    %c0_123 = arith.constant 0 : index
    %c5_124 = arith.constant 5 : index
    %251 = vector.load %arg15[%c0_123, %c5_124] : memref<8x384xf32, #tpu.memory_space<vmem>>, vector<8x256xf32>
    %c0_125 = arith.constant 0 : index
    %c5_126 = arith.constant 5 : index
    %252 = vector.load %arg6[%c0_125, %c5_126] : memref<8x49xf32, #tpu.memory_space<vmem>>, vector<8x1xf32>
    %253 = vector.broadcast %252 : vector<8x1xf32> to vector<8x256xf32>
    %254 = arith.mulf %253, %251 : vector<8x256xf32>
    %255 = arith.addf %250, %254 : vector<8x256xf32>
    %c0_127 = arith.constant 0 : index
    %c21_128 = arith.constant 21 : index
    %256 = vector.load %arg15[%c0_127, %c21_128] : memref<8x384xf32, #tpu.memory_space<vmem>>, vector<8x256xf32>
    %c0_129 = arith.constant 0 : index
    %c12 = arith.constant 12 : index
    %257 = vector.load %arg6[%c0_129, %c12] : memref<8x49xf32, #tpu.memory_space<vmem>>, vector<8x1xf32>
    %258 = vector.broadcast %257 : vector<8x1xf32> to vector<8x256xf32>
    %259 = arith.mulf %258, %256 : vector<8x256xf32>
    %260 = arith.addf %255, %259 : vector<8x256xf32>
    %c0_130 = arith.constant 0 : index
    %c37_131 = arith.constant 37 : index
    %261 = vector.load %arg15[%c0_130, %c37_131] : memref<8x384xf32, #tpu.memory_space<vmem>>, vector<8x256xf32>
    %c0_132 = arith.constant 0 : index
    %c19_133 = arith.constant 19 : index
    %262 = vector.load %arg6[%c0_132, %c19_133] : memref<8x49xf32, #tpu.memory_space<vmem>>, vector<8x1xf32>
    %263 = vector.broadcast %262 : vector<8x1xf32> to vector<8x256xf32>
    %264 = arith.mulf %263, %261 : vector<8x256xf32>
    %265 = arith.addf %260, %264 : vector<8x256xf32>
    %c0_134 = arith.constant 0 : index
    %c53 = arith.constant 53 : index
    %266 = vector.load %arg15[%c0_134, %c53] : memref<8x384xf32, #tpu.memory_space<vmem>>, vector<8x256xf32>
    %c0_135 = arith.constant 0 : index
    %c26 = arith.constant 26 : index
    %267 = vector.load %arg6[%c0_135, %c26] : memref<8x49xf32, #tpu.memory_space<vmem>>, vector<8x1xf32>
    %268 = vector.broadcast %267 : vector<8x1xf32> to vector<8x256xf32>
    %269 = arith.mulf %268, %266 : vector<8x256xf32>
    %270 = arith.addf %265, %269 : vector<8x256xf32>
    %c0_136 = arith.constant 0 : index
    %c69 = arith.constant 69 : index
    %271 = vector.load %arg15[%c0_136, %c69] : memref<8x384xf32, #tpu.memory_space<vmem>>, vector<8x256xf32>
    %c0_137 = arith.constant 0 : index
    %c33_138 = arith.constant 33 : index
    %272 = vector.load %arg6[%c0_137, %c33_138] : memref<8x49xf32, #tpu.memory_space<vmem>>, vector<8x1xf32>
    %273 = vector.broadcast %272 : vector<8x1xf32> to vector<8x256xf32>
    %274 = arith.mulf %273, %271 : vector<8x256xf32>
    %275 = arith.addf %270, %274 : vector<8x256xf32>
    %c0_139 = arith.constant 0 : index
    %c85 = arith.constant 85 : index
    %276 = vector.load %arg15[%c0_139, %c85] : memref<8x384xf32, #tpu.memory_space<vmem>>, vector<8x256xf32>
    %c0_140 = arith.constant 0 : index
    %c40 = arith.constant 40 : index
    %277 = vector.load %arg6[%c0_140, %c40] : memref<8x49xf32, #tpu.memory_space<vmem>>, vector<8x1xf32>
    %278 = vector.broadcast %277 : vector<8x1xf32> to vector<8x256xf32>
    %279 = arith.mulf %278, %276 : vector<8x256xf32>
    %280 = arith.addf %275, %279 : vector<8x256xf32>
    %c0_141 = arith.constant 0 : index
    %c101 = arith.constant 101 : index
    %281 = vector.load %arg15[%c0_141, %c101] : memref<8x384xf32, #tpu.memory_space<vmem>>, vector<8x256xf32>
    %c0_142 = arith.constant 0 : index
    %c47 = arith.constant 47 : index
    %282 = vector.load %arg6[%c0_142, %c47] : memref<8x49xf32, #tpu.memory_space<vmem>>, vector<8x1xf32>
    %283 = vector.broadcast %282 : vector<8x1xf32> to vector<8x256xf32>
    %284 = arith.mulf %283, %281 : vector<8x256xf32>
    %285 = arith.addf %280, %284 : vector<8x256xf32>
    %c5_143 = arith.constant 5 : index
    %c0_144 = arith.constant 0 : index
    %286 = vector.load %arg2[%c5_143, %c0_144] : memref<8x256xf32, #tpu.memory_space<vmem>>, vector<1x256xf32>
    %287 = vector.broadcast %286 : vector<1x256xf32> to vector<8x256xf32>
    %288 = arith.mulf %285, %287 : vector<8x256xf32>
    %289 = arith.addf %246, %288 : vector<8x256xf32>
    %cst_145 = arith.constant 0.000000e+00 : f32
    %290 = vector.broadcast %cst_145 : f32 to vector<8x256xf32>
    %c0_146 = arith.constant 0 : index
    %c6_147 = arith.constant 6 : index
    %291 = vector.load %arg15[%c0_146, %c6_147] : memref<8x384xf32, #tpu.memory_space<vmem>>, vector<8x256xf32>
    %c0_148 = arith.constant 0 : index
    %c6_149 = arith.constant 6 : index
    %292 = vector.load %arg6[%c0_148, %c6_149] : memref<8x49xf32, #tpu.memory_space<vmem>>, vector<8x1xf32>
    %293 = vector.broadcast %292 : vector<8x1xf32> to vector<8x256xf32>
    %294 = arith.mulf %293, %291 : vector<8x256xf32>
    %295 = arith.addf %290, %294 : vector<8x256xf32>
    %c0_150 = arith.constant 0 : index
    %c22_151 = arith.constant 22 : index
    %296 = vector.load %arg15[%c0_150, %c22_151] : memref<8x384xf32, #tpu.memory_space<vmem>>, vector<8x256xf32>
    %c0_152 = arith.constant 0 : index
    %c13 = arith.constant 13 : index
    %297 = vector.load %arg6[%c0_152, %c13] : memref<8x49xf32, #tpu.memory_space<vmem>>, vector<8x1xf32>
    %298 = vector.broadcast %297 : vector<8x1xf32> to vector<8x256xf32>
    %299 = arith.mulf %298, %296 : vector<8x256xf32>
    %300 = arith.addf %295, %299 : vector<8x256xf32>
    %c0_153 = arith.constant 0 : index
    %c38_154 = arith.constant 38 : index
    %301 = vector.load %arg15[%c0_153, %c38_154] : memref<8x384xf32, #tpu.memory_space<vmem>>, vector<8x256xf32>
    %c0_155 = arith.constant 0 : index
    %c20_156 = arith.constant 20 : index
    %302 = vector.load %arg6[%c0_155, %c20_156] : memref<8x49xf32, #tpu.memory_space<vmem>>, vector<8x1xf32>
    %303 = vector.broadcast %302 : vector<8x1xf32> to vector<8x256xf32>
    %304 = arith.mulf %303, %301 : vector<8x256xf32>
    %305 = arith.addf %300, %304 : vector<8x256xf32>
    %c0_157 = arith.constant 0 : index
    %c54 = arith.constant 54 : index
    %306 = vector.load %arg15[%c0_157, %c54] : memref<8x384xf32, #tpu.memory_space<vmem>>, vector<8x256xf32>
    %c0_158 = arith.constant 0 : index
    %c27 = arith.constant 27 : index
    %307 = vector.load %arg6[%c0_158, %c27] : memref<8x49xf32, #tpu.memory_space<vmem>>, vector<8x1xf32>
    %308 = vector.broadcast %307 : vector<8x1xf32> to vector<8x256xf32>
    %309 = arith.mulf %308, %306 : vector<8x256xf32>
    %310 = arith.addf %305, %309 : vector<8x256xf32>
    %c0_159 = arith.constant 0 : index
    %c70 = arith.constant 70 : index
    %311 = vector.load %arg15[%c0_159, %c70] : memref<8x384xf32, #tpu.memory_space<vmem>>, vector<8x256xf32>
    %c0_160 = arith.constant 0 : index
    %c34_161 = arith.constant 34 : index
    %312 = vector.load %arg6[%c0_160, %c34_161] : memref<8x49xf32, #tpu.memory_space<vmem>>, vector<8x1xf32>
    %313 = vector.broadcast %312 : vector<8x1xf32> to vector<8x256xf32>
    %314 = arith.mulf %313, %311 : vector<8x256xf32>
    %315 = arith.addf %310, %314 : vector<8x256xf32>
    %c0_162 = arith.constant 0 : index
    %c86 = arith.constant 86 : index
    %316 = vector.load %arg15[%c0_162, %c86] : memref<8x384xf32, #tpu.memory_space<vmem>>, vector<8x256xf32>
    %c0_163 = arith.constant 0 : index
    %c41 = arith.constant 41 : index
    %317 = vector.load %arg6[%c0_163, %c41] : memref<8x49xf32, #tpu.memory_space<vmem>>, vector<8x1xf32>
    %318 = vector.broadcast %317 : vector<8x1xf32> to vector<8x256xf32>
    %319 = arith.mulf %318, %316 : vector<8x256xf32>
    %320 = arith.addf %315, %319 : vector<8x256xf32>
    %c0_164 = arith.constant 0 : index
    %c102 = arith.constant 102 : index
    %321 = vector.load %arg15[%c0_164, %c102] : memref<8x384xf32, #tpu.memory_space<vmem>>, vector<8x256xf32>
    %c0_165 = arith.constant 0 : index
    %c48_166 = arith.constant 48 : index
    %322 = vector.load %arg6[%c0_165, %c48_166] : memref<8x49xf32, #tpu.memory_space<vmem>>, vector<8x1xf32>
    %323 = vector.broadcast %322 : vector<8x1xf32> to vector<8x256xf32>
    %324 = arith.mulf %323, %321 : vector<8x256xf32>
    %325 = arith.addf %320, %324 : vector<8x256xf32>
    %c6_167 = arith.constant 6 : index
    %c0_168 = arith.constant 0 : index
    %326 = vector.load %arg2[%c6_167, %c0_168] : memref<8x256xf32, #tpu.memory_space<vmem>>, vector<1x256xf32>
    %327 = vector.broadcast %326 : vector<1x256xf32> to vector<8x256xf32>
    %328 = arith.mulf %325, %327 : vector<8x256xf32>
    %329 = arith.addf %289, %328 : vector<8x256xf32>
    %c0_169 = arith.constant 0 : index
    %c0_170 = arith.constant 0 : index
    %330 = vector.load %arg12[%c0_169, %c0_170] : memref<8x1xf32, #tpu.memory_space<vmem>>, vector<8x1xf32>
    %c0_171 = arith.constant 0 : index
    %c0_172 = arith.constant 0 : index
    %331 = vector.load %arg4[%c0_171, %c0_172] : memref<8x1xf32, #tpu.memory_space<vmem>>, vector<8x1xf32>
    %332 = vector.broadcast %331 : vector<8x1xf32> to vector<8x256xf32>
    %333 = arith.mulf %332, %1 : vector<8x256xf32>
    %334 = arith.addf %249, %333 : vector<8x256xf32>
    %c0_173 = arith.constant 0 : index
    %c0_174 = arith.constant 0 : index
    %335 = vector.load %arg5[%c0_173, %c0_174] : memref<8x1xf32, #tpu.memory_space<vmem>>, vector<8x1xf32>
    %336 = vector.broadcast %335 : vector<8x1xf32> to vector<8x256xf32>
    %337 = arith.addf %334, %336 : vector<8x256xf32>
    %338 = vector.broadcast %330 : vector<8x1xf32> to vector<8x256xf32>
    %339 = arith.mulf %338, %337 : vector<8x256xf32>
    %340 = arith.addf %1, %339 : vector<8x256xf32>
    %c0_175 = arith.constant 0 : index
    %c0_176 = arith.constant 0 : index
    %341 = vector.load %arg7[%c0_175, %c0_176] : memref<8x1xf32, #tpu.memory_space<vmem>>, vector<8x1xf32>
    %342 = vector.broadcast %341 : vector<8x1xf32> to vector<8x256xf32>
    %343 = arith.addf %329, %342 : vector<8x256xf32>
    %344 = arith.truncf %343 : vector<8x256xf32> to vector<8x256xbf16>
    %c0_177 = arith.constant 0 : index
    %c0_178 = arith.constant 0 : index
    %345 = vector.load %arg8[%c0_177, %c0_178] : memref<32x8xbf16, #tpu.memory_space<vmem>>, vector<32x8xbf16>
    %cst_179 = arith.constant dense<0.000000e+00> : vector<32x256xf32>
    %346 = tpu.matmul %345, %344, %cst_179 {dimension_numbers = #tpu.dot_dimension_numbers<[1], [0], [0], [1], [0, 0, 1, 1], [], []>} : vector<32x8xbf16>, vector<8x256xbf16>, vector<32x256xf32> -> vector<32x256xf32>
    %c0_180 = arith.constant 0 : index
    %c0_181 = arith.constant 0 : index
    %347 = vector.load %arg9[%c0_180, %c0_181] : memref<32x1xf32, #tpu.memory_space<vmem>>, vector<32x1xf32>
    %348 = vector.broadcast %347 : vector<32x1xf32> to vector<32x256xf32>
    %349 = arith.addf %346, %348 : vector<32x256xf32>
    %cst_182 = arith.constant 0.000000e+00 : f32
    %350 = vector.broadcast %cst_182 : f32 to vector<32x256xf32>
    %351 = arith.maximumf %349, %350 : vector<32x256xf32>
    %352 = arith.truncf %351 : vector<32x256xf32> to vector<32x256xbf16>
    %c0_183 = arith.constant 0 : index
    %c0_184 = arith.constant 0 : index
    %353 = vector.load %arg10[%c0_183, %c0_184] : memref<8x32xbf16, #tpu.memory_space<vmem>>, vector<8x32xbf16>
    %cst_185 = arith.constant dense<0.000000e+00> : vector<8x256xf32>
    %354 = tpu.matmul %353, %352, %cst_185 {dimension_numbers = #tpu.dot_dimension_numbers<[1], [0], [0], [1], [0, 0, 1, 1], [], []>} : vector<8x32xbf16>, vector<32x256xbf16>, vector<8x256xf32> -> vector<8x256xf32>
    %c0_186 = arith.constant 0 : index
    %c0_187 = arith.constant 0 : index
    %355 = vector.load %arg11[%c0_186, %c0_187] : memref<8x1xf32, #tpu.memory_space<vmem>>, vector<8x1xf32>
    %356 = vector.broadcast %355 : vector<8x1xf32> to vector<8x256xf32>
    %357 = arith.addf %354, %356 : vector<8x256xf32>
    %c0_188 = arith.constant 0 : index
    %c0_189 = arith.constant 0 : index
    %358 = vector.load %arg13[%c0_188, %c0_189] : memref<8x1xf32, #tpu.memory_space<vmem>>, vector<8x1xf32>
    %359 = vector.broadcast %358 : vector<8x1xf32> to vector<8x256xf32>
    %360 = arith.mulf %359, %357 : vector<8x256xf32>
    %361 = arith.addf %340, %360 : vector<8x256xf32>
    %c0_190 = arith.constant 0 : index
    %c0_191 = arith.constant 0 : index
    %c0_192 = arith.constant 0 : index
    %362 = vector.load %arg14[%c0_190, %c0_191, %c0_192] : memref<1x8x256xf32, #tpu.memory_space<vmem>>, vector<1x8x256xf32>
    %363 = vector.shape_cast %362 : vector<1x8x256xf32> to vector<8x256xf32>
    %364 = vector.shape_cast %361 : vector<8x256xf32> to vector<1x8x256xf32>
    tpu.vector_store %arg14[%c0_190, %c0_191, %c0_192], %364 {strides = array<i32>} : memref<1x8x256xf32, #tpu.memory_space<vmem>>, vector<1x8x256xf32>,
    return
  }
  func.func @transform_0(%arg0: i32) -> (i32, i32, i32) {
    %c0_i32 = arith.constant 0 : i32
    %c0_i32_0 = arith.constant 0 : i32
    %c0_i32_1 = arith.constant 0 : i32
    return %arg0, %c0_i32, %c0_i32_0 : i32, i32, i32
  }
  func.func @transform_1(%arg0: i32) -> (i32, i32) {
    %c0_i32 = arith.constant 0 : i32
    %c0_i32_0 = arith.constant 0 : i32
    %c0_i32_1 = arith.constant 0 : i32
    return %c0_i32, %c0_i32_0 : i32, i32
  }
  func.func @transform_2(%arg0: i32) -> (i32, i32) {
    %c0_i32 = arith.constant 0 : i32
    %c0_i32_0 = arith.constant 0 : i32
    %c0_i32_1 = arith.constant 0 : i32
    return %c0_i32, %c0_i32_0 : i32, i32
  }
  func.func @transform_3(%arg0: i32) -> (i32, i32) {
    %c0_i32 = arith.constant 0 : i32
    %c0_i32_0 = arith.constant 0 : i32
    %c0_i32_1 = arith.constant 0 : i32
    return %c0_i32, %c0_i32_0 : i32, i32
  }
  func.func @transform_4(%arg0: i32) -> (i32, i32) {
    %c0_i32 = arith.constant 0 : i32
    %c0_i32_0 = arith.constant 0 : i32
    %c0_i32_1 = arith.constant 0 : i32
    return %c0_i32, %c0_i32_0 : i32, i32
  }
  func.func @transform_5(%arg0: i32) -> (i32, i32) {
    %c0_i32 = arith.constant 0 : i32
    %c0_i32_0 = arith.constant 0 : i32
    %c0_i32_1 = arith.constant 0 : i32
    return %c0_i32, %c0_i32_0 : i32, i32
  }
  func.func @transform_6(%arg0: i32) -> (i32, i32) {
    %c0_i32 = arith.constant 0 : i32
    %c0_i32_0 = arith.constant 0 : i32
    %c0_i32_1 = arith.constant 0 : i32
    return %c0_i32, %c0_i32_0 : i32, i32
  }
  func.func @transform_7(%arg0: i32) -> (i32, i32) {
    %c0_i32 = arith.constant 0 : i32
    %c0_i32_0 = arith.constant 0 : i32
    %c0_i32_1 = arith.constant 0 : i32
    return %c0_i32, %c0_i32_0 : i32, i32
  }
  func.func @transform_8(%arg0: i32) -> (i32, i32) {
    %c0_i32 = arith.constant 0 : i32
    %c0_i32_0 = arith.constant 0 : i32
    %c0_i32_1 = arith.constant 0 : i32
    return %c0_i32, %c0_i32_0 : i32, i32
  }
  func.func @transform_9(%arg0: i32) -> (i32, i32) {
    %c0_i32 = arith.constant 0 : i32
    %c0_i32_0 = arith.constant 0 : i32
    %c0_i32_1 = arith.constant 0 : i32
    return %c0_i32, %c0_i32_0 : i32, i32
  }
  func.func @transform_10(%arg0: i32) -> (i32, i32) {
    %c0_i32 = arith.constant 0 : i32
    %c0_i32_0 = arith.constant 0 : i32
    %c0_i32_1 = arith.constant 0 : i32
    return %c0_i32, %c0_i32_0 : i32, i32
  }
  func.func @transform_11(%arg0: i32) -> (i32, i32) {
    %c0_i32 = arith.constant 0 : i32
    %c0_i32_0 = arith.constant 0 : i32
    %c0_i32_1 = arith.constant 0 : i32
    return %c0_i32, %c0_i32_0 : i32, i32
  }
  func.func @transform_12(%arg0: i32) -> (i32, i32) {
    %c0_i32 = arith.constant 0 : i32
    %c0_i32_0 = arith.constant 0 : i32
    %c0_i32_1 = arith.constant 0 : i32
    return %c0_i32, %c0_i32_0 : i32, i32
  }
  func.func @transform_13(%arg0: i32) -> (i32, i32, i32) {
    %c0_i32 = arith.constant 0 : i32
    %c0_i32_0 = arith.constant 0 : i32
    %c0_i32_1 = arith.constant 0 : i32
    return %arg0, %c0_i32, %c0_i32_0 : i32, i32, i32
  }
}

</mosaic_0001>

<llo_original>
// kernel: tpu_custom_call.1
$region0: #{tpu_custom_call.1}
  #allocation0 [shape = 'u32[]', space=smem, size = 0x4, offset = 0x4, fixed_abs, tag = 'smem constant byte address 0x4 - core index']
  #allocation1 [shape = 'u32[144,128]{1,0:T(1,128)}', space=vmem, size = 0x12000, scoped, tag = 'internal scratch']
  #allocation2 [shape = 'f32[8,384]{1,0:T(8,128)}', space=vmem, size = 0x3000, scoped, tag = 'scratch operand']
  %s0 = inlined_call_operand.vmem [shape: f32[2,8,256], index: 0, kind: input, shape index: {}]
  %s1 = inlined_call_operand.vmem [shape: f32[8,256], index: 1, kind: input, shape index: {}]
  %s2 = inlined_call_operand.vmem [shape: f32[8,9], index: 2, kind: input, shape index: {}]
  %s3 = inlined_call_operand.vmem [shape: f32[8,1], index: 3, kind: input, shape index: {}]
  %s4 = inlined_call_operand.vmem [shape: f32[8,1], index: 4, kind: input, shape index: {}]
  %s5 = inlined_call_operand.vmem [shape: f32[8,49], index: 5, kind: input, shape index: {}]
  %s6 = inlined_call_operand.vmem [shape: f32[8,1], index: 6, kind: input, shape index: {}]
  %s7 = inlined_call_operand.vmem [shape: bf16[32,8], index: 7, kind: input, shape index: {}]
  %s8 = inlined_call_operand.vmem [shape: f32[32,1], index: 8, kind: input, shape index: {}]
  %s9 = inlined_call_operand.vmem [shape: bf16[8,32], index: 9, kind: input, shape index: {}]
  %s10 = inlined_call_operand.vmem [shape: f32[8,1], index: 10, kind: input, shape index: {}]
  %s11 = inlined_call_operand.vmem [shape: f32[8,1], index: 11, kind: input, shape index: {}]
  %s12 = inlined_call_operand.vmem [shape: f32[8,1], index: 12, kind: input, shape index: {}]
  %s13 = inlined_call_operand.hbm [shape: f32[2,8,256], index: 13, kind: output, shape index: {}]
  %s14 = sld [smem:[#allocation0]]
  $region85: #{tpu_custom_call.1} parent=0
    _
  %s16 = ssub.s32 1, %s14
  %s17 = scalar_select 0, %s16, %s14
  $region1: #{tpu_custom_call.1} parent=0
    #allocation3 [shape = 'u8[16384]{0}', space=vmem, size = 0x4000, scoped, tag = 'output window, operand 0']
    #allocation4 [shape = 's32[2]{0}', space=sflag, size = 0x8, scoped, tag = 'scoped memory for tpu_custom_call.1']
    %18 = vsyncpa [#allocation4], 0
    %s19 = scalar_lea.sflag [#allocation4], 1
    %20 = vsyncpa %s19, 0
    loop: start=0, step=1, limit=4
    $region2: #{tpu_custom_call.1} parent=1 // loop_pre_header
      _
    $region3: #{tpu_custom_call.1} parent=1 // loop_header
      %s22 = sphi 0, %s26
      %p23 = scmp.ge.s32.totalorder %s22, 4
      %s32 = sphi 0, %s34
      %s35 = sphi 0, %s32
      %s36 = sphi 0, %s35
      %s52 = sphi 0, %s36
      %s56 = sphi 0, %s56
      %s58 = sphi 0, %s56
      %s59 = sphi 0, %s58
      %s73 = sphi 0, %s59
      %s77 = sphi 0, %s77
      %s79 = sphi 0, %s77
      %s80 = sphi 0, %s79
      %s94 = sphi 0, %s80
      %s98 = sphi 0, %s98
      %s100 = sphi 0, %s98
      %s101 = sphi 0, %s100
      %s115 = sphi 0, %s101
      %s119 = sphi 0, %s119
      %s121 = sphi 0, %s119
      %s122 = sphi 0, %s121
      %s136 = sphi 0, %s122
      %s140 = sphi 0, %s140
      %s142 = sphi 0, %s140
      %s143 = sphi 0, %s142
      %s157 = sphi 0, %s143
      %s161 = sphi 0, %s161
      %s163 = sphi 0, %s161
      %s164 = sphi 0, %s163
      %s178 = sphi 0, %s164
      %s182 = sphi 0, %s182
      %s184 = sphi 0, %s182
      %s185 = sphi 0, %s184
      %s199 = sphi 0, %s185
      %s203 = sphi 0, %s203
      %s205 = sphi 0, %s203
      %s206 = sphi 0, %s205
      %s220 = sphi 0, %s206
      %s224 = sphi 0, %s224
      %s226 = sphi 0, %s224
      %s227 = sphi 0, %s226
      %s241 = sphi 0, %s227
      %s245 = sphi 0, %s245
      %s247 = sphi 0, %s245
      %s248 = sphi 0, %s247
      %s262 = sphi 0, %s248
      %s266 = sphi 0, %s266
      %s268 = sphi 0, %s266
      %s269 = sphi 0, %s268
      %s283 = sphi 0, %s269
      %s287 = sphi 0, %s287
      %s289 = sphi 0, %s287
      %s290 = sphi 0, %s289
      %s304 = sphi 0, %s290
      %s310 = sphi 0, %s312
      %s313 = sphi 0, %s310
      %s314 = sphi 0, %s313
      %s330 = sphi 0, %s314
    $region4: #{tpu_custom_call.1} parent=1 // loop_header_branch
      %25 = sbr.rel (%p23) target = $region8
    $region5: #{tpu_custom_call.1} parent=1 // loop_body
      %s27 = ssub.s32 %s22, 1
      %s28 = ssub.s32 %s22, 2
      %s29 = sadd.s32 %s22, 1
      %s30 = ssub.s32 %s22, %s29
      %p31 = scmp.eq.s32.totalorder %s30, 0
      %s33 = sadd.s32 %s32, 1
      %s34 = scalar_select %p31, %s32, %s33
      %p37 = pneg %p31
      %p38 = scmp.eq.s32.totalorder %s22, 1
      %p39 = por %p37, %p38
      %p40 = scmp.ne.s32.totalorder %s32, %s35
      %p41 = scmp.eq.s32.totalorder %s22, 0
      %p42 = por %p40, %p41
      %p43 = scmp.ne.s32.totalorder %s32, %s35
      %p44 = scmp.eq.s32.totalorder %s27, 1
      %p45 = por %p43, %p44
      %p46 = scmp.ne.s32.totalorder %s35, %s36
      %p47 = scmp.eq.s32.totalorder %s27, 0
      %p48 = por %p46, %p47
      %p49 = scmp.ne.s32.totalorder %s35, %s36
      %p50 = scmp.eq.s32.totalorder %s28, 1
      %p51 = por %p49, %p50
      %p53 = scmp.ne.s32.totalorder %s36, %s52
      %p54 = scmp.eq.s32.totalorder %s28, 0
      %p55 = por %p53, %p54
      %s57 = sadd.s32 %s56, 1
      %p60 = scmp.eq.s32.totalorder %s22, 1
      %p61 = scmp.ne.s32.totalorder %s56, %s58
      %p62 = scmp.eq.s32.totalorder %s22, 0
      %p63 = por %p61, %p62
      %p64 = scmp.ne.s32.totalorder %s56, %s58
      %p65 = scmp.eq.s32.totalorder %s27, 1
      %p66 = por %p64, %p65
      %p67 = scmp.ne.s32.totalorder %s58, %s59
      %p68 = scmp.eq.s32.totalorder %s27, 0
      %p69 = por %p67, %p68
      %p70 = scmp.ne.s32.totalorder %s58, %s59
      %p71 = scmp.eq.s32.totalorder %s28, 1
      %p72 = por %p70, %p71
      %p74 = scmp.ne.s32.totalorder %s59, %s73
      %p75 = scmp.eq.s32.totalorder %s28, 0
      %p76 = por %p74, %p75
      %s78 = sadd.s32 %s77, 1
      %p81 = scmp.eq.s32.totalorder %s22, 1
      %p82 = scmp.ne.s32.totalorder %s77, %s79
      %p83 = scmp.eq.s32.totalorder %s22, 0
      %p84 = por %p82, %p83
      %p85 = scmp.ne.s32.totalorder %s77, %s79
      %p86 = scmp.eq.s32.totalorder %s27, 1
      %p87 = por %p85, %p86
      %p88 = scmp.ne.s32.totalorder %s79, %s80
      %p89 = scmp.eq.s32.totalorder %s27, 0
      %p90 = por %p88, %p89
      %p91 = scmp.ne.s32.totalorder %s79, %s80
      %p92 = scmp.eq.s32.totalorder %s28, 1
      %p93 = por %p91, %p92
      %p95 = scmp.ne.s32.totalorder %s80, %s94
      %p96 = scmp.eq.s32.totalorder %s28, 0
      %p97 = por %p95, %p96
      %s99 = sadd.s32 %s98, 1
      %p102 = scmp.eq.s32.totalorder %s22, 1
      %p103 = scmp.ne.s32.totalorder %s98, %s100
      %p104 = scmp.eq.s32.totalorder %s22, 0
      %p105 = por %p103, %p104
      %p106 = scmp.ne.s32.totalorder %s98, %s100
      %p107 = scmp.eq.s32.totalorder %s27, 1
      %p108 = por %p106, %p107
      %p109 = scmp.ne.s32.totalorder %s100, %s101
      %p110 = scmp.eq.s32.totalorder %s27, 0
      %p111 = por %p109, %p110
      %p112 = scmp.ne.s32.totalorder %s100, %s101
      %p113 = scmp.eq.s32.totalorder %s28, 1
      %p114 = por %p112, %p113
      %p116 = scmp.ne.s32.totalorder %s101, %s115
      %p117 = scmp.eq.s32.totalorder %s28, 0
      %p118 = por %p116, %p117
      %s120 = sadd.s32 %s119, 1
      %p123 = scmp.eq.s32.totalorder %s22, 1
      %p124 = scmp.ne.s32.totalorder %s119, %s121
      %p125 = scmp.eq.s32.totalorder %s22, 0
      %p126 = por %p124, %p125
      %p127 = scmp.ne.s32.totalorder %s119, %s121
      %p128 = scmp.eq.s32.totalorder %s27, 1
      %p129 = por %p127, %p128
      %p130 = scmp.ne.s32.totalorder %s121, %s122
      %p131 = scmp.eq.s32.totalorder %s27, 0
      %p132 = por %p130, %p131
      %p133 = scmp.ne.s32.totalorder %s121, %s122
      %p134 = scmp.eq.s32.totalorder %s28, 1
      %p135 = por %p133, %p134
      %p137 = scmp.ne.s32.totalorder %s122, %s136
      %p138 = scmp.eq.s32.totalorder %s28, 0
      %p139 = por %p137, %p138
      %s141 = sadd.s32 %s140, 1
      %p144 = scmp.eq.s32.totalorder %s22, 1
      %p145 = scmp.ne.s32.totalorder %s140, %s142
      %p146 = scmp.eq.s32.totalorder %s22, 0
      %p147 = por %p145, %p146
      %p148 = scmp.ne.s32.totalorder %s140, %s142
      %p149 = scmp.eq.s32.totalorder %s27, 1
      %p150 = por %p148, %p149
      %p151 = scmp.ne.s32.totalorder %s142, %s143
      %p152 = scmp.eq.s32.totalorder %s27, 0
      %p153 = por %p151, %p152
      %p154 = scmp.ne.s32.totalorder %s142, %s143
      %p155 = scmp.eq.s32.totalorder %s28, 1
      %p156 = por %p154, %p155
      %p158 = scmp.ne.s32.totalorder %s143, %s157
      %p159 = scmp.eq.s32.totalorder %s28, 0
      %p160 = por %p158, %p159
      %s162 = sadd.s32 %s161, 1
      %p165 = scmp.eq.s32.totalorder %s22, 1
      %p166 = scmp.ne.s32.totalorder %s161, %s163
      %p167 = scmp.eq.s32.totalorder %s22, 0
      %p168 = por %p166, %p167
      %p169 = scmp.ne.s32.totalorder %s161, %s163
      %p170 = scmp.eq.s32.totalorder %s27, 1
      %p171 = por %p169, %p170
      %p172 = scmp.ne.s32.totalorder %s163, %s164
      %p173 = scmp.eq.s32.totalorder %s27, 0
      %p174 = por %p172, %p173
      %p175 = scmp.ne.s32.totalorder %s163, %s164
      %p176 = scmp.eq.s32.totalorder %s28, 1
      %p177 = por %p175, %p176
      %p179 = scmp.ne.s32.totalorder %s164, %s178
      %p180 = scmp.eq.s32.totalorder %s28, 0
      %p181 = por %p179, %p180
      %s183 = sadd.s32 %s182, 1
      %p186 = scmp.eq.s32.totalorder %s22, 1
      %p187 = scmp.ne.s32.totalorder %s182, %s184
      %p188 = scmp.eq.s32.totalorder %s22, 0
      %p189 = por %p187, %p188
      %p190 = scmp.ne.s32.totalorder %s182, %s184
      %p191 = scmp.eq.s32.totalorder %s27, 1
      %p192 = por %p190, %p191
      %p193 = scmp.ne.s32.totalorder %s184, %s185
      %p194 = scmp.eq.s32.totalorder %s27, 0
      %p195 = por %p193, %p194
      %p196 = scmp.ne.s32.totalorder %s184, %s185
      %p197 = scmp.eq.s32.totalorder %s28, 1
      %p198 = por %p196, %p197
      %p200 = scmp.ne.s32.totalorder %s185, %s199
      %p201 = scmp.eq.s32.totalorder %s28, 0
      %p202 = por %p200, %p201
      %s204 = sadd.s32 %s203, 1
      %p207 = scmp.eq.s32.totalorder %s22, 1
      %p208 = scmp.ne.s32.totalorder %s203, %s205
      %p209 = scmp.eq.s32.totalorder %s22, 0
      %p210 = por %p208, %p209
      %p211 = scmp.ne.s32.totalorder %s203, %s205
      %p212 = scmp.eq.s32.totalorder %s27, 1
      %p213 = por %p211, %p212
      %p214 = scmp.ne.s32.totalorder %s205, %s206
      %p215 = scmp.eq.s32.totalorder %s27, 0
      %p216 = por %p214, %p215
      %p217 = scmp.ne.s32.totalorder %s205, %s206
      %p218 = scmp.eq.s32.totalorder %s28, 1
      %p219 = por %p217, %p218
      %p221 = scmp.ne.s32.totalorder %s206, %s220
      %p222 = scmp.eq.s32.totalorder %s28, 0
      %p223 = por %p221, %p222
      %s225 = sadd.s32 %s224, 1
      %p228 = scmp.eq.s32.totalorder %s22, 1
      %p229 = scmp.ne.s32.totalorder %s224, %s226
      %p230 = scmp.eq.s32.totalorder %s22, 0
      %p231 = por %p229, %p230
      %p232 = scmp.ne.s32.totalorder %s224, %s226
      %p233 = scmp.eq.s32.totalorder %s27, 1
      %p234 = por %p232, %p233
      %p235 = scmp.ne.s32.totalorder %s226, %s227
      %p236 = scmp.eq.s32.totalorder %s27, 0
      %p237 = por %p235, %p236
      %p238 = scmp.ne.s32.totalorder %s226, %s227
      %p239 = scmp.eq.s32.totalorder %s28, 1
      %p240 = por %p238, %p239
      %p242 = scmp.ne.s32.totalorder %s227, %s241
      %p243 = scmp.eq.s32.totalorder %s28, 0
      %p244 = por %p242, %p243
      %s246 = sadd.s32 %s245, 1
      %p249 = scmp.eq.s32.totalorder %s22, 1
      %p250 = scmp.ne.s32.totalorder %s245, %s247
      %p251 = scmp.eq.s32.totalorder %s22, 0
      %p252 = por %p250, %p251
      %p253 = scmp.ne.s32.totalorder %s245, %s247
      %p254 = scmp.eq.s32.totalorder %s27, 1
      %p255 = por %p253, %p254
      %p256 = scmp.ne.s32.totalorder %s247, %s248
      %p257 = scmp.eq.s32.totalorder %s27, 0
      %p258 = por %p256, %p257
      %p259 = scmp.ne.s32.totalorder %s247, %s248
      %p260 = scmp.eq.s32.totalorder %s28, 1
      %p261 = por %p259, %p260
      %p263 = scmp.ne.s32.totalorder %s248, %s262
      %p264 = scmp.eq.s32.totalorder %s28, 0
      %p265 = por %p263, %p264
      %s267 = sadd.s32 %s266, 1
      %p270 = scmp.eq.s32.totalorder %s22, 1
      %p271 = scmp.ne.s32.totalorder %s266, %s268
      %p272 = scmp.eq.s32.totalorder %s22, 0
      %p273 = por %p271, %p272
      %p274 = scmp.ne.s32.totalorder %s266, %s268
      %p275 = scmp.eq.s32.totalorder %s27, 1
      %p276 = por %p274, %p275
      %p277 = scmp.ne.s32.totalorder %s268, %s269
      %p278 = scmp.eq.s32.totalorder %s27, 0
      %p279 = por %p277, %p278
      %p280 = scmp.ne.s32.totalorder %s268, %s269
      %p281 = scmp.eq.s32.totalorder %s28, 1
      %p282 = por %p280, %p281
      %p284 = scmp.ne.s32.totalorder %s269, %s283
      %p285 = scmp.eq.s32.totalorder %s28, 0
      %p286 = por %p284, %p285
      %s288 = sadd.s32 %s287, 1
      %p291 = scmp.eq.s32.totalorder %s22, 1
      %p292 = scmp.ne.s32.totalorder %s287, %s289
      %p293 = scmp.eq.s32.totalorder %s22, 0
      %p294 = por %p292, %p293
      %p295 = scmp.ne.s32.totalorder %s287, %s289
      %p296 = scmp.eq.s32.totalorder %s27, 1
      %p297 = por %p295, %p296
      %p298 = scmp.ne.s32.totalorder %s289, %s290
      %p299 = scmp.eq.s32.totalorder %s27, 0
      %p300 = por %p298, %p299
      %p301 = scmp.ne.s32.totalorder %s289, %s290
      %p302 = scmp.eq.s32.totalorder %s28, 1
      %p303 = por %p301, %p302
      %p305 = scmp.ne.s32.totalorder %s290, %s304
      %p306 = scmp.eq.s32.totalorder %s28, 0
      %p307 = por %p305, %p306
      %s308 = ssub.s32 %s22, %s29
      %p309 = scmp.eq.s32.totalorder %s308, 0
      %s311 = sadd.s32 %s310, 1
      %s312 = scalar_select %p309, %s310, %s311
      %p315 = pneg %p309
      %p316 = scmp.eq.s32.totalorder %s22, 1
      %p317 = por %p315, %p316
      %p318 = scmp.ne.s32.totalorder %s310, %s313
      %p319 = scmp.eq.s32.totalorder %s22, 0
      %p320 = por %p318, %p319
      %p321 = scmp.ne.s32.totalorder %s310, %s313
      %p322 = scmp.eq.s32.totalorder %s27, 1
      %p323 = por %p321, %p322
      %p324 = scmp.ne.s32.totalorder %s313, %s314
      %p325 = scmp.eq.s32.totalorder %s27, 0
      %p326 = por %p324, %p325
      %p327 = scmp.ne.s32.totalorder %s313, %s314
      %p328 = scmp.eq.s32.totalorder %s28, 1
      %p329 = por %p327, %p328
      %p331 = scmp.ne.s32.totalorder %s314, %s330
      %p332 = scmp.eq.s32.totalorder %s28, 0
      %p333 = por %p331, %p332
      %p334 = scmp.le.s32.totalorder 1, %s22
      %p335 = scmp.lt.s32.totalorder %s22, 3
      %p336 = pnand %p334, %p335
      %p337 = pneg %p336
      // Predicated region
      $region9: #{tpu_custom_call.1} parent=5 // pred_check
        _
      $region10: #{tpu_custom_call.1} parent=5 // pred_check_branch
        %339 = sbr.rel (%p336) target = $region12
      $region11: #{tpu_custom_call.1} parent=5 // pred_region
        %s340 = ssub.s32 %s22, 1
        // Predicated region
        $region13: #{tpu_custom_call.1} parent=11 // pred_check
          %p341 = pneg %p69
        $region14: #{tpu_custom_call.1} parent=11 // pred_check_branch
          %343 = sbr.rel (%p341) target = $region16
        $region15: #{tpu_custom_call.1} parent=11 // pred_region
          _
        $region16: #{tpu_custom_call.1} parent=11 // pred_fallthru
          _
        // Predicated region
        $region17: #{tpu_custom_call.1} parent=11 // pred_check
          %p344 = pneg %p90
        $region18: #{tpu_custom_call.1} parent=11 // pred_check_branch
          %346 = sbr.rel (%p344) target = $region20
        $region19: #{tpu_custom_call.1} parent=11 // pred_region
          _
        $region20: #{tpu_custom_call.1} parent=11 // pred_fallthru
          _
        // Predicated region
        $region21: #{tpu_custom_call.1} parent=11 // pred_check
          %p347 = pneg %p111
        $region22: #{tpu_custom_call.1} parent=11 // pred_check_branch
          %349 = sbr.rel (%p347) target = $region24
        $region23: #{tpu_custom_call.1} parent=11 // pred_region
          _
        $region24: #{tpu_custom_call.1} parent=11 // pred_fallthru
          _
        // Predicated region
        $region25: #{tpu_custom_call.1} parent=11 // pred_check
          %p350 = pneg %p132
        $region26: #{tpu_custom_call.1} parent=11 // pred_check_branch
          %352 = sbr.rel (%p350) target = $region28
        $region27: #{tpu_custom_call.1} parent=11 // pred_region
          _
        $region28: #{tpu_custom_call.1} parent=11 // pred_fallthru
          _
        // Predicated region
        $region29: #{tpu_custom_call.1} parent=11 // pred_check
          %p353 = pneg %p153
        $region30: #{tpu_custom_call.1} parent=11 // pred_check_branch
          %355 = sbr.rel (%p353) target = $region32
        $region31: #{tpu_custom_call.1} parent=11 // pred_region
          _
        $region32: #{tpu_custom_call.1} parent=11 // pred_fallthru
          _
        // Predicated region
        $region33: #{tpu_custom_call.1} parent=11 // pred_check
          %p356 = pneg %p174
        $region34: #{tpu_custom_call.1} parent=11 // pred_check_branch
          %358 = sbr.rel (%p356) target = $region36
        $region35: #{tpu_custom_call.1} parent=11 // pred_region
          _
        $region36: #{tpu_custom_call.1} parent=11 // pred_fallthru
          _
        // Predicated region
        $region37: #{tpu_custom_call.1} parent=11 // pred_check
          %p359 = pneg %p195
        $region38: #{tpu_custom_call.1} parent=11 // pred_check_branch
          %361 = sbr.rel (%p359) target = $region40
        $region39: #{tpu_custom_call.1} parent=11 // pred_region
          _
        $region40: #{tpu_custom_call.1} parent=11 // pred_fallthru
          _
        // Predicated region
        $region41: #{tpu_custom_call.1} parent=11 // pred_check
          %p362 = pneg %p216
        $region42: #{tpu_custom_call.1} parent=11 // pred_check_branch
          %364 = sbr.rel (%p362) target = $region44
        $region43: #{tpu_custom_call.1} parent=11 // pred_region
          _
        $region44: #{tpu_custom_call.1} parent=11 // pred_fallthru
          _
        // Predicated region
        $region45: #{tpu_custom_call.1} parent=11 // pred_check
          %p365 = pneg %p237
        $region46: #{tpu_custom_call.1} parent=11 // pred_check_branch
          %367 = sbr.rel (%p365) target = $region48
        $region47: #{tpu_custom_call.1} parent=11 // pred_region
          _
        $region48: #{tpu_custom_call.1} parent=11 // pred_fallthru
          _
        // Predicated region
        $region49: #{tpu_custom_call.1} parent=11 // pred_check
          %p368 = pneg %p258
        $region50: #{tpu_custom_call.1} parent=11 // pred_check_branch
          %370 = sbr.rel (%p368) target = $region52
        $region51: #{tpu_custom_call.1} parent=11 // pred_region
          _
        $region52: #{tpu_custom_call.1} parent=11 // pred_fallthru
          _
        // Predicated region
        $region53: #{tpu_custom_call.1} parent=11 // pred_check
          %p371 = pneg %p279
        $region54: #{tpu_custom_call.1} parent=11 // pred_check_branch
          %373 = sbr.rel (%p371) target = $region56
        $region55: #{tpu_custom_call.1} parent=11 // pred_region
          _
        $region56: #{tpu_custom_call.1} parent=11 // pred_fallthru
          _
        // Predicated region
        $region57: #{tpu_custom_call.1} parent=11 // pred_check
          %p374 = pneg %p300
        $region58: #{tpu_custom_call.1} parent=11 // pred_check_branch
          %376 = sbr.rel (%p374) target = $region60
        $region59: #{tpu_custom_call.1} parent=11 // pred_region
          _
        $region60: #{tpu_custom_call.1} parent=11 // pred_fallthru
          _
      $region12: #{tpu_custom_call.1} parent=5 // pred_fallthru
        _
      %p377 = scmp.lt.s32.totalorder %s22, 2
      // Predicated region
      $region61: #{tpu_custom_call.1} parent=5 // pred_check
        %p378 = pneg %p377
      $region62: #{tpu_custom_call.1} parent=5 // pred_check_branch
        %380 = sbr.rel (%p378) target = $region64
      $region63: #{tpu_custom_call.1} parent=5 // pred_region
        // Predicated region
        $region65: #{tpu_custom_call.1} parent=63 // pred_check
          %p381 = pneg %p42
        $region66: #{tpu_custom_call.1} parent=63 // pred_check_branch
          %383 = sbr.rel (%p381) target = $region68
        $region67: #{tpu_custom_call.1} parent=63 // pred_region
          %p384 = scmp.lt.s32.totalorder %s22, 1
          %s385 = scalar_select %p384, %s22, 1
          %s386 = smul.addr %s385, 2
          %s387 = smul.addr %s386, 8
          %s388 = scalar_lea.vmem %s0, %s387
        $region68: #{tpu_custom_call.1} parent=63 // pred_fallthru
          _
      $region64: #{tpu_custom_call.1} parent=5 // pred_fallthru
        _
      %p389 = scmp.le.s32.totalorder 1, %s22
      %p390 = scmp.lt.s32.totalorder %s22, 3
      %p391 = pnand %p389, %p390
      %p392 = pneg %p391
      // Predicated region
      $region69: #{tpu_custom_call.1} parent=5 // pred_check
        _
      $region70: #{tpu_custom_call.1} parent=5 // pred_check_branch
        %394 = sbr.rel (%p391) target = $region72
      $region71: #{tpu_custom_call.1} parent=5 // pred_region
        %s395 = ssub.s32 %s22, 1
        %p396 = scmp.lt.s32.totalorder %s27, 1
        %s397 = scalar_select %p396, %s27, 1
        %s398 = smul.addr %s397, 2
        %s399 = smul.addr %s398, 8
        %s400 = scalar_lea.vmem %s0, %s399
        %p401 = pneg %p48
        %p402 = pneg %p45
        %p403 = pneg %p69
        %p404 = pneg %p66
        %p405 = pneg %p90
        %p406 = pneg %p87
        %p407 = pneg %p111
        %p408 = pneg %p108
        %p409 = pneg %p132
        %p410 = pneg %p129
        %p411 = pneg %p153
        %p412 = pneg %p150
        %p413 = pneg %p174
        %p414 = pneg %p171
        %p415 = pneg %p195
        %p416 = pneg %p192
        %p417 = pneg %p216
        %p418 = pneg %p213
        %p419 = pneg %p237
        %p420 = pneg %p234
        %p421 = pneg %p258
        %p422 = pneg %p255
        %p423 = pneg %p279
        %p424 = pneg %p276
        %p425 = pneg %p300
        %p426 = pneg %p297
        %p427 = pneg %p326
        %p428 = pneg %p323
        %s429 = sand.u32 %s313, 1
        %s430 = scalar_lea.sflag [#allocation4], %s429
        %s431 = sand.u32 %s313, 1
        %s432 = smul.addr %s431, 16
        %s433 = scalar_lea.vmem [#allocation3], %s432
        %p434 = scmp.lt.s32.totalorder %s27, 1
        %s435 = scalar_select %p434, %s27, 1
        %s436 = smul.addr %s435, 2
        %s437 = smul.addr %s436, 8
        %s438 = scalar_lea.vmem %s0, %s437
        %v440 = vld [vmem:[%s438] sm:$0xff]
        %v441 = vld [vmem:[%s438 + $0x8] sm:$0xff]
        %442 = vst [vmem:[#allocation2] sm:$0xff] 0.0
        %443 = vst [vmem:[#allocation2 + $0x8] sm:$0xff] 0.0
        %444 = vst [vmem:[#allocation2 + $0x10] sm:$0xff] 0.0
        %447 = vrot.lane.b32.xlu0 %v440, 51
        %v448 = vpop.permute.xlu0 %447
        %449 = vrot.lane.b32.xlu0 %v441, 51
        %v450 = vpop.permute.xlu0 %449
        %vm451 = vcmask 416768
        %v452 = vsel %vm451, %v448, %v450
        %vm456 = vcmask 1047960
        %457 = vst.msk [vmem:[#allocation2] sm:$0xff] %vm456, %v448
        %458 = vst [vmem:[#allocation2 + $0x8] sm:$0xff] %v452
        %459 = vst.msk [vmem:[#allocation2 + $0x10] sm:$0xff] %vm451, %v450
        %v460 = vld [vmem:[#allocation2] sm:$0xff]
        %v461 = vld [vmem:[#allocation2 + $0x8] sm:$0xff]
        %v462 = vld [vmem:[%s5] sm:$0xff]
        %464 = vset.pattern.permute.xlu0 0
        %465 = vperm.xlu0 %464, %v462
        %v466 = vpop.permute.xlu0 %465
        %v468 = vmul.f32 %v466, %v460
        %v469 = vmul.f32 %v466, %v461
        %v470 = vadd.f32 %v468, 0.0
        %v471 = vadd.f32 %v469, 0.0
        %v472 = vld [vmem:[#allocation2] sm:$0xff]
        %v473 = vld [vmem:[#allocation2 + $0x8] sm:$0xff]
        %v474 = vld [vmem:[#allocation2 + $0x10] sm:$0xff]
        %475 = vset.pattern.permute.xlu0 7
        %476 = vperm.xlu0 %475, %v462
        %v477 = vpop.permute.xlu0 %476
        %v479 = vmul.f32 %v477, %v472
        %v480 = vmul.f32 %v477, %v473
        %v481 = vmul.f32 %v477, %v474
        %485 = vrot.lane.b32.xlu0 %v479, 112
        %v486 = vpop.permute.xlu0 %485
        %487 = vrot.lane.b32.xlu0 %v480, 112
        %v488 = vpop.permute.xlu0 %487
        %489 = vrot.lane.b32.xlu0 %v481, 112
        %v490 = vpop.permute.xlu0 %489
        %vm491 = vcmask 916480
        %v492 = vsel %vm491, %v486, %v488
        %v493 = vsel %vm491, %v488, %v490
        %v496 = vadd.f32 %v470, %v492
        %v497 = vadd.f32 %v471, %v493
        %498 = vset.pattern.permute.xlu0 14
        %499 = vperm.xlu0 %498, %v462
        %v500 = vpop.permute.xlu0 %499
        %v502 = vmul.f32 %v500, %v472
        %v503 = vmul.f32 %v500, %v473
        %v504 = vmul.f32 %v500, %v474
        %508 = vrot.lane.b32.xlu0 %v502, 96
        %v509 = vpop.permute.xlu0 %508
        %510 = vrot.lane.b32.xlu0 %v503, 96
        %v511 = vpop.permute.xlu0 %510
        %512 = vrot.lane.b32.xlu0 %v504, 96
        %v513 = vpop.permute.xlu0 %512
        %vm514 = vcmask 785408
        %v515 = vsel %vm514, %v509, %v511
        %v516 = vsel %vm514, %v511, %v513
        %v519 = vadd.f32 %v496, %v515
        %v520 = vadd.f32 %v497, %v516
        %521 = vset.pattern.permute.xlu0 21
        %522 = vperm.xlu0 %521, %v462
        %v523 = vpop.permute.xlu0 %522
        %v525 = vmul.f32 %v523, %v472
        %v526 = vmul.f32 %v523, %v473
        %v527 = vmul.f32 %v523, %v474
        %531 = vrot.lane.b32.xlu0 %v525, 80
        %v532 = vpop.permute.xlu0 %531
        %533 = vrot.lane.b32.xlu0 %v526, 80
        %v534 = vpop.permute.xlu0 %533
        %535 = vrot.lane.b32.xlu0 %v527, 80
        %v536 = vpop.permute.xlu0 %535
        %vm537 = vcmask 654336
        %v538 = vsel %vm537, %v532, %v534
        %v539 = vsel %vm537, %v534, %v536
        %v542 = vadd.f32 %v519, %v538
        %v543 = vadd.f32 %v520, %v539
        %544 = vset.pattern.permute.xlu0 28
        %545 = vperm.xlu0 %544, %v462
        %v546 = vpop.permute.xlu0 %545
        %v548 = vmul.f32 %v546, %v472
        %v549 = vmul.f32 %v546, %v473
        %v550 = vmul.f32 %v546, %v474
        %554 = vrot.lane.b32.xlu0 %v548, 64
        %v555 = vpop.permute.xlu0 %554
        %556 = vrot.lane.b32.xlu0 %v549, 64
        %v557 = vpop.permute.xlu0 %556
        %558 = vrot.lane.b32.xlu0 %v550, 64
        %v559 = vpop.permute.xlu0 %558
        %vm560 = vcmask 523264
        %v561 = vsel %vm560, %v555, %v557
        %v562 = vsel %vm560, %v557, %v559
        %v565 = vadd.f32 %v542, %v561
        %v566 = vadd.f32 %v543, %v562
        %567 = vset.pattern.permute.xlu0 35
        %568 = vperm.xlu0 %567, %v462
        %v569 = vpop.permute.xlu0 %568
        %v571 = vmul.f32 %v569, %v472
        %v572 = vmul.f32 %v569, %v473
        %v573 = vmul.f32 %v569, %v474
        %577 = vrot.lane.b32.xlu0 %v571, 48
        %v578 = vpop.permute.xlu0 %577
        %579 = vrot.lane.b32.xlu0 %v572, 48
        %v580 = vpop.permute.xlu0 %579
        %581 = vrot.lane.b32.xlu0 %v573, 48
        %v582 = vpop.permute.xlu0 %581
        %vm583 = vcmask 392192
        %v584 = vsel %vm583, %v578, %v580
        %v585 = vsel %vm583, %v580, %v582
        %v588 = vadd.f32 %v565, %v584
        %v589 = vadd.f32 %v566, %v585
        %590 = vset.pattern.permute.xlu0 42
        %591 = vperm.xlu0 %590, %v462
        %v592 = vpop.permute.xlu0 %591
        %v594 = vmul.f32 %v592, %v472
        %v595 = vmul.f32 %v592, %v473
        %v596 = vmul.f32 %v592, %v474
        %600 = vrot.lane.b32.xlu0 %v594, 32
        %v601 = vpop.permute.xlu0 %600
        %602 = vrot.lane.b32.xlu0 %v595, 32
        %v603 = vpop.permute.xlu0 %602
        %604 = vrot.lane.b32.xlu0 %v596, 32
        %v605 = vpop.permute.xlu0 %604
        %vm606 = vcmask 261120
        %v607 = vsel %vm606, %v601, %v603
        %v608 = vsel %vm606, %v603, %v605
        %v611 = vadd.f32 %v588, %v607
        %v612 = vadd.f32 %v589, %v608
        %v613 = vld [vmem:[%s1] ss:$8 sm:$0x3]
        %v615 = vlaneseq
        %v616 = vshrl.u32 %v615, 7
        %v617 = vsub.s32 0, %v616
        %v618 = vrot.slane %v613, %v617
        %v619 = vlaneseq
        %v620 = vshrl.u32 %v619, 7
        %v621 = vsub.s32 1, %v620
        %v622 = vrot.slane %v613, %v621
        %v625 = vmul.f32 %v611, %v618
        %v626 = vmul.f32 %v612, %v622
        %v627 = vadd.f32 %v625, 0.0
        %v628 = vadd.f32 %v626, 0.0
        %629 = vset.pattern.permute.xlu0 1
        %630 = vperm.xlu0 %629, %v462
        %v631 = vpop.permute.xlu0 %630
        %v633 = vmul.f32 %v631, %v472
        %v634 = vmul.f32 %v631, %v473
        %v635 = vmul.f32 %v631, %v474
        %v636 = vadd.f32 %v633, 0.0
        %v637 = vadd.f32 %v634, 0.0
        %v638 = vadd.f32 %v635, 0.0
        %639 = vset.pattern.permute.xlu0 8
        %640 = vperm.xlu0 %639, %v462
        %v641 = vpop.permute.xlu0 %640
        %v643 = vmul.f32 %v641, %v472
        %v644 = vmul.f32 %v641, %v473
        %v645 = vmul.f32 %v641, %v474
        %649 = vrot.lane.b32.xlu0 %v643, 112
        %v650 = vpop.permute.xlu0 %649
        %651 = vrot.lane.b32.xlu0 %v644, 112
        %v652 = vpop.permute.xlu0 %651
        %653 = vrot.lane.b32.xlu0 %v645, 112
        %v654 = vpop.permute.xlu0 %653
        %v655 = vsel %vm491, %v650, %v652
        %v656 = vsel %vm491, %v652, %v654
        %v660 = vadd.f32 %v636, %v655
        %v661 = vadd.f32 %v637, %v656
        %v662 = vadd.f32 %v638, %v654
        %663 = vset.pattern.permute.xlu0 15
        %664 = vperm.xlu0 %663, %v462
        %v665 = vpop.permute.xlu0 %664
        %v667 = vmul.f32 %v665, %v472
        %v668 = vmul.f32 %v665, %v473
        %v669 = vmul.f32 %v665, %v474
        %673 = vrot.lane.b32.xlu0 %v667, 96
        %v674 = vpop.permute.xlu0 %673
        %675 = vrot.lane.b32.xlu0 %v668, 96
        %v676 = vpop.permute.xlu0 %675
        %677 = vrot.lane.b32.xlu0 %v669, 96
        %v678 = vpop.permute.xlu0 %677
        %v679 = vsel %vm514, %v674, %v676
        %v680 = vsel %vm514, %v676, %v678
        %v684 = vadd.f32 %v660, %v679
        %v685 = vadd.f32 %v661, %v680
        %v686 = vadd.f32 %v662, %v678
        %687 = vset.pattern.permute.xlu0 22
        %688 = vperm.xlu0 %687, %v462
        %v689 = vpop.permute.xlu0 %688
        %v691 = vmul.f32 %v689, %v472
        %v692 = vmul.f32 %v689, %v473
        %v693 = vmul.f32 %v689, %v474
        %697 = vrot.lane.b32.xlu0 %v691, 80
        %v698 = vpop.permute.xlu0 %697
        %699 = vrot.lane.b32.xlu0 %v692, 80
        %v700 = vpop.permute.xlu0 %699
        %701 = vrot.lane.b32.xlu0 %v693, 80
        %v702 = vpop.permute.xlu0 %701
        %v703 = vsel %vm537, %v698, %v700
        %v704 = vsel %vm537, %v700, %v702
        %v708 = vadd.f32 %v684, %v703
        %v709 = vadd.f32 %v685, %v704
        %v710 = vadd.f32 %v686, %v702
        %711 = vset.pattern.permute.xlu0 29
        %712 = vperm.xlu0 %711, %v462
        %v713 = vpop.permute.xlu0 %712
        %v715 = vmul.f32 %v713, %v472
        %v716 = vmul.f32 %v713, %v473
        %v717 = vmul.f32 %v713, %v474
        %721 = vrot.lane.b32.xlu0 %v715, 64
        %v722 = vpop.permute.xlu0 %721
        %723 = vrot.lane.b32.xlu0 %v716, 64
        %v724 = vpop.permute.xlu0 %723
        %725 = vrot.lane.b32.xlu0 %v717, 64
        %v726 = vpop.permute.xlu0 %725
        %v727 = vsel %vm560, %v722, %v724
        %v728 = vsel %vm560, %v724, %v726
        %v732 = vadd.f32 %v708, %v727
        %v733 = vadd.f32 %v709, %v728
        %v734 = vadd.f32 %v710, %v726
        %735 = vset.pattern.permute.xlu0 36
        %736 = vperm.xlu0 %735, %v462
        %v737 = vpop.permute.xlu0 %736
        %v739 = vmul.f32 %v737, %v472
        %v740 = vmul.f32 %v737, %v473
        %v741 = vmul.f32 %v737, %v474
        %745 = vrot.lane.b32.xlu0 %v739, 48
        %v746 = vpop.permute.xlu0 %745
        %747 = vrot.lane.b32.xlu0 %v740, 48
        %v748 = vpop.permute.xlu0 %747
        %749 = vrot.lane.b32.xlu0 %v741, 48
        %v750 = vpop.permute.xlu0 %749
        %v751 = vsel %vm583, %v746, %v748
        %v752 = vsel %vm583, %v748, %v750
        %v756 = vadd.f32 %v732, %v751
        %v757 = vadd.f32 %v733, %v752
        %v758 = vadd.f32 %v734, %v750
        %759 = vset.pattern.permute.xlu0 43
        %760 = vperm.xlu0 %759, %v462
        %v761 = vpop.permute.xlu0 %760
        %v763 = vmul.f32 %v761, %v472
        %v764 = vmul.f32 %v761, %v473
        %v765 = vmul.f32 %v761, %v474
        %769 = vrot.lane.b32.xlu0 %v763, 32
        %v770 = vpop.permute.xlu0 %769
        %771 = vrot.lane.b32.xlu0 %v764, 32
        %v772 = vpop.permute.xlu0 %771
        %773 = vrot.lane.b32.xlu0 %v765, 32
        %v774 = vpop.permute.xlu0 %773
        %v775 = vsel %vm606, %v770, %v772
        %v776 = vsel %vm606, %v772, %v774
        %v780 = vadd.f32 %v756, %v775
        %v781 = vadd.f32 %v757, %v776
        %v782 = vadd.f32 %v758, %v774
        %s783 = scalar_lea.vmem %s1, 1
        %v784 = vld [vmem:[%s783] ss:$8 sm:$0x3]
        %v786 = vlaneseq
        %v787 = vshrl.u32 %v786, 7
        %v788 = vsub.s32 0, %v787
        %v789 = vrot.slane %v784, %v788
        %v790 = vlaneseq
        %v791 = vshrl.u32 %v790, 7
        %v792 = vsub.s32 1, %v791
        %v793 = vrot.slane %v784, %v792
        %794 = vrot.lane.b32.xlu0 %v789, 1
        %v795 = vpop.permute.xlu0 %794
        %796 = vrot.lane.b32.xlu0 %v793, 1
        %v797 = vpop.permute.xlu0 %796
        %vm798 = vcmask 7168
        %v799 = vsel %vm798, %v795, %v797
        %v803 = vmul.f32 %v780, %v795
        %v804 = vmul.f32 %v781, %v799
        %v805 = vmul.f32 %v782, %v797
        %809 = vrot.lane.b32.xlu0 %v803, 127
        %v810 = vpop.permute.xlu0 %809
        %811 = vrot.lane.b32.xlu0 %v804, 127
        %v812 = vpop.permute.xlu0 %811
        %813 = vrot.lane.b32.xlu0 %v805, 127
        %v814 = vpop.permute.xlu0 %813
        %vm815 = vcmask 1039360
        %v816 = vsel %vm815, %v810, %v812
        %v817 = vsel %vm815, %v812, %v814
        %v820 = vadd.f32 %v627, %v816
        %v821 = vadd.f32 %v628, %v817
        %822 = vset.pattern.permute.xlu0 2
        %823 = vperm.xlu0 %822, %v462
        %v824 = vpop.permute.xlu0 %823
        %v826 = vmul.f32 %v824, %v472
        %v827 = vmul.f32 %v824, %v473
        %v828 = vmul.f32 %v824, %v474
        %v829 = vadd.f32 %v826, 0.0
        %v830 = vadd.f32 %v827, 0.0
        %v831 = vadd.f32 %v828, 0.0
        %832 = vset.pattern.permute.xlu0 9
        %833 = vperm.xlu0 %832, %v462
        %v834 = vpop.permute.xlu0 %833
        %v836 = vmul.f32 %v834, %v472
        %v837 = vmul.f32 %v834, %v473
        %v838 = vmul.f32 %v834, %v474
        %842 = vrot.lane.b32.xlu0 %v836, 112
        %v843 = vpop.permute.xlu0 %842
        %844 = vrot.lane.b32.xlu0 %v837, 112
        %v845 = vpop.permute.xlu0 %844
        %846 = vrot.lane.b32.xlu0 %v838, 112
        %v847 = vpop.permute.xlu0 %846
        %v848 = vsel %vm491, %v843, %v845
        %v849 = vsel %vm491, %v845, %v847
        %v853 = vadd.f32 %v829, %v848
        %v854 = vadd.f32 %v830, %v849
        %v855 = vadd.f32 %v831, %v847
        %856 = vset.pattern.permute.xlu0 16
        %857 = vperm.xlu0 %856, %v462
        %v858 = vpop.permute.xlu0 %857
        %v860 = vmul.f32 %v858, %v472
        %v861 = vmul.f32 %v858, %v473
        %v862 = vmul.f32 %v858, %v474
        %866 = vrot.lane.b32.xlu0 %v860, 96
        %v867 = vpop.permute.xlu0 %866
        %868 = vrot.lane.b32.xlu0 %v861, 96
        %v869 = vpop.permute.xlu0 %868
        %870 = vrot.lane.b32.xlu0 %v862, 96
        %v871 = vpop.permute.xlu0 %870
        %v872 = vsel %vm514, %v867, %v869
        %v873 = vsel %vm514, %v869, %v871
        %v877 = vadd.f32 %v853, %v872
        %v878 = vadd.f32 %v854, %v873
        %v879 = vadd.f32 %v855, %v871
        %v880 = vld [vmem:[%s2] sm:$0xff]
        %882 = vset.pattern.permute.xlu0 0
        %883 = vperm.xlu0 %882, %v880
        %v884 = vpop.permute.xlu0 %883
        %v886 = vmul.f32 %v884, %v472
        %v887 = vmul.f32 %v884, %v473
        %v888 = vmul.f32 %v884, %v474
        %v889 = vadd.f32 %v886, 0.0
        %v890 = vadd.f32 %v887, 0.0
        %v891 = vadd.f32 %v888, 0.0
        %892 = vset.pattern.permute.xlu0 23
        %893 = vperm.xlu0 %892, %v462
        %v894 = vpop.permute.xlu0 %893
        %v896 = vmul.f32 %v894, %v472
        %v897 = vmul.f32 %v894, %v473
        %v898 = vmul.f32 %v894, %v474
        %902 = vrot.lane.b32.xlu0 %v896, 80
        %v903 = vpop.permute.xlu0 %902
        %904 = vrot.lane.b32.xlu0 %v897, 80
        %v905 = vpop.permute.xlu0 %904
        %906 = vrot.lane.b32.xlu0 %v898, 80
        %v907 = vpop.permute.xlu0 %906
        %v908 = vsel %vm537, %v903, %v905
        %v909 = vsel %vm537, %v905, %v907
        %v913 = vadd.f32 %v877, %v908
        %v914 = vadd.f32 %v878, %v909
        %v915 = vadd.f32 %v879, %v907
        %916 = vset.pattern.permute.xlu0 3
        %917 = vperm.xlu0 %916, %v880
        %v918 = vpop.permute.xlu0 %917
        %v920 = vmul.f32 %v918, %v472
        %v921 = vmul.f32 %v918, %v473
        %v922 = vmul.f32 %v918, %v474
        %926 = vrot.lane.b32.xlu0 %v920, 112
        %v927 = vpop.permute.xlu0 %926
        %928 = vrot.lane.b32.xlu0 %v921, 112
        %v929 = vpop.permute.xlu0 %928
        %930 = vrot.lane.b32.xlu0 %v922, 112
        %v931 = vpop.permute.xlu0 %930
        %v932 = vsel %vm491, %v927, %v929
        %v933 = vsel %vm491, %v929, %v931
        %v937 = vadd.f32 %v889, %v932
        %v938 = vadd.f32 %v890, %v933
        %v939 = vadd.f32 %v891, %v931
        %940 = vset.pattern.permute.xlu0 30
        %941 = vperm.xlu0 %940, %v462
        %v942 = vpop.permute.xlu0 %941
        %v944 = vmul.f32 %v942, %v472
        %v945 = vmul.f32 %v942, %v473
        %v946 = vmul.f32 %v942, %v474
        %950 = vrot.lane.b32.xlu0 %v944, 64
        %v951 = vpop.permute.xlu0 %950
        %952 = vrot.lane.b32.xlu0 %v945, 64
        %v953 = vpop.permute.xlu0 %952
        %954 = vrot.lane.b32.xlu0 %v946, 64
        %v955 = vpop.permute.xlu0 %954
        %v956 = vsel %vm560, %v951, %v953
        %v957 = vsel %vm560, %v953, %v955
        %v961 = vadd.f32 %v913, %v956
        %v962 = vadd.f32 %v914, %v957
        %v963 = vadd.f32 %v915, %v955
        %964 = vset.pattern.permute.xlu0 6
        %965 = vperm.xlu0 %964, %v880
        %v966 = vpop.permute.xlu0 %965
        %v968 = vmul.f32 %v966, %v472
        %v969 = vmul.f32 %v966, %v473
        %v970 = vmul.f32 %v966, %v474
        %974 = vrot.lane.b32.xlu0 %v968, 96
        %v975 = vpop.permute.xlu0 %974
        %976 = vrot.lane.b32.xlu0 %v969, 96
        %v977 = vpop.permute.xlu0 %976
        %978 = vrot.lane.b32.xlu0 %v970, 96
        %v979 = vpop.permute.xlu0 %978
        %v980 = vsel %vm514, %v975, %v977
        %v981 = vsel %vm514, %v977, %v979
        %v985 = vadd.f32 %v937, %v980
        %v986 = vadd.f32 %v938, %v981
        %v987 = vadd.f32 %v939, %v979
        %988 = vset.pattern.permute.xlu0 37
        %989 = vperm.xlu0 %988, %v462
        %v990 = vpop.permute.xlu0 %989
        %v992 = vmul.f32 %v990, %v472
        %v993 = vmul.f32 %v990, %v473
        %v994 = vmul.f32 %v990, %v474
        %998 = vrot.lane.b32.xlu0 %v992, 48
        %v999 = vpop.permute.xlu0 %998
        %1000 = vrot.lane.b32.xlu0 %v993, 48
        %v1001 = vpop.permute.xlu0 %1000
        %1002 = vrot.lane.b32.xlu0 %v994, 48
        %v1003 = vpop.permute.xlu0 %1002
        %v1004 = vsel %vm583, %v999, %v1001
        %v1005 = vsel %vm583, %v1001, %v1003
        %v1009 = vadd.f32 %v961, %v1004
        %v1010 = vadd.f32 %v962, %v1005
        %v1011 = vadd.f32 %v963, %v1003
        %1012 = vset.pattern.permute.xlu0 44
        %1013 = vperm.xlu0 %1012, %v462
        %v1014 = vpop.permute.xlu0 %1013
        %v1016 = vmul.f32 %v1014, %v472
        %v1017 = vmul.f32 %v1014, %v473
        %v1018 = vmul.f32 %v1014, %v474
        %1022 = vrot.lane.b32.xlu0 %v1016, 32
        %v1023 = vpop.permute.xlu0 %1022
        %1024 = vrot.lane.b32.xlu0 %v1017, 32
        %v1025 = vpop.permute.xlu0 %1024
        %1026 = vrot.lane.b32.xlu0 %v1018, 32
        %v1027 = vpop.permute.xlu0 %1026
        %v1028 = vsel %vm606, %v1023, %v1025
        %v1029 = vsel %vm606, %v1025, %v1027
        %v1033 = vadd.f32 %v1009, %v1028
        %v1034 = vadd.f32 %v1010, %v1029
        %v1035 = vadd.f32 %v1011, %v1027
        %s1036 = scalar_lea.vmem %s1, 2
        %v1037 = vld [vmem:[%s1036] ss:$8 sm:$0x3]
        %v1039 = vlaneseq
        %v1040 = vshrl.u32 %v1039, 7
        %v1041 = vsub.s32 0, %v1040
        %v1042 = vrot.slane %v1037, %v1041
        %v1043 = vlaneseq
        %v1044 = vshrl.u32 %v1043, 7
        %v1045 = vsub.s32 1, %v1044
        %v1046 = vrot.slane %v1037, %v1045
        %1047 = vrot.lane.b32.xlu0 %v1042, 2
        %v1048 = vpop.permute.xlu0 %1047
        %1049 = vrot.lane.b32.xlu0 %v1046, 2
        %v1050 = vpop.permute.xlu0 %1049
        %vm1051 = vcmask 15360
        %v1052 = vsel %vm1051, %v1048, %v1050
        %v1056 = vmul.f32 %v1033, %v1048
        %v1057 = vmul.f32 %v1034, %v1052
        %v1058 = vmul.f32 %v1035, %v1050
        %1062 = vrot.lane.b32.xlu0 %v1056, 126
        %v1063 = vpop.permute.xlu0 %1062
        %1064 = vrot.lane.b32.xlu0 %v1057, 126
        %v1065 = vpop.permute.xlu0 %1064
        %1066 = vrot.lane.b32.xlu0 %v1058, 126
        %v1067 = vpop.permute.xlu0 %1066
        %vm1068 = vcmask 1031168
        %v1069 = vsel %vm1068, %v1063, %v1065
        %v1070 = vsel %vm1068, %v1065, %v1067
        %v1073 = vadd.f32 %v820, %v1069
        %v1074 = vadd.f32 %v821, %v1070
        %1075 = vrot.lane.b32.xlu0 %v1042, 34
        %v1076 = vpop.permute.xlu0 %1075
        %1077 = vrot.lane.b32.xlu0 %v1046, 34
        %v1078 = vpop.permute.xlu0 %1077
        %vm1079 = vcmask 277504
        %v1080 = vsel %vm1079, %v1076, %v1078
        %v1084 = vmul.f32 %v985, %v1076
        %v1085 = vmul.f32 %v986, %v1080
        %v1086 = vmul.f32 %v987, %v1078
        %v1087 = vadd.f32 %v1084, 0.0
        %v1088 = vadd.f32 %v1085, 0.0
        %v1089 = vadd.f32 %v1086, 0.0
        %1090 = vset.pattern.permute.xlu0 3
        %1091 = vperm.xlu0 %1090, %v462
        %v1092 = vpop.permute.xlu0 %1091
        %v1094 = vmul.f32 %v1092, %v472
        %v1095 = vmul.f32 %v1092, %v473
        %v1096 = vmul.f32 %v1092, %v474
        %v1097 = vadd.f32 %v1094, 0.0
        %v1098 = vadd.f32 %v1095, 0.0
        %v1099 = vadd.f32 %v1096, 0.0
        %1100 = vset.pattern.permute.xlu0 10
        %1101 = vperm.xlu0 %1100, %v462
        %v1102 = vpop.permute.xlu0 %1101
        %v1104 = vmul.f32 %v1102, %v472
        %v1105 = vmul.f32 %v1102, %v473
        %v1106 = vmul.f32 %v1102, %v474
        %1110 = vrot.lane.b32.xlu0 %v1104, 112
        %v1111 = vpop.permute.xlu0 %1110
        %1112 = vrot.lane.b32.xlu0 %v1105, 112
        %v1113 = vpop.permute.xlu0 %1112
        %1114 = vrot.lane.b32.xlu0 %v1106, 112
        %v1115 = vpop.permute.xlu0 %1114
        %v1116 = vsel %vm491, %v1111, %v1113
        %v1117 = vsel %vm491, %v1113, %v1115
        %v1121 = vadd.f32 %v1097, %v1116
        %v1122 = vadd.f32 %v1098, %v1117
        %v1123 = vadd.f32 %v1099, %v1115
        %1124 = vset.pattern.permute.xlu0 17
        %1125 = vperm.xlu0 %1124, %v462
        %v1126 = vpop.permute.xlu0 %1125
        %v1128 = vmul.f32 %v1126, %v472
        %v1129 = vmul.f32 %v1126, %v473
        %v1130 = vmul.f32 %v1126, %v474
        %1134 = vrot.lane.b32.xlu0 %v1128, 96
        %v1135 = vpop.permute.xlu0 %1134
        %1136 = vrot.lane.b32.xlu0 %v1129, 96
        %v1137 = vpop.permute.xlu0 %1136
        %1138 = vrot.lane.b32.xlu0 %v1130, 96
        %v1139 = vpop.permute.xlu0 %1138
        %v1140 = vsel %vm514, %v1135, %v1137
        %v1141 = vsel %vm514, %v1137, %v1139
        %v1145 = vadd.f32 %v1121, %v1140
        %v1146 = vadd.f32 %v1122, %v1141
        %v1147 = vadd.f32 %v1123, %v1139
        %1148 = vset.pattern.permute.xlu0 1
        %1149 = vperm.xlu0 %1148, %v880
        %v1150 = vpop.permute.xlu0 %1149
        %v1152 = vmul.f32 %v1150, %v472
        %v1153 = vmul.f32 %v1150, %v473
        %v1154 = vmul.f32 %v1150, %v474
        %v1155 = vadd.f32 %v1152, 0.0
        %v1156 = vadd.f32 %v1153, 0.0
        %v1157 = vadd.f32 %v1154, 0.0
        %1158 = vset.pattern.permute.xlu0 24
        %1159 = vperm.xlu0 %1158, %v462
        %v1160 = vpop.permute.xlu0 %1159
        %v1162 = vmul.f32 %v1160, %v472
        %v1163 = vmul.f32 %v1160, %v473
        %v1164 = vmul.f32 %v1160, %v474
        %1168 = vrot.lane.b32.xlu0 %v1162, 80
        %v1169 = vpop.permute.xlu0 %1168
        %1170 = vrot.lane.b32.xlu0 %v1163, 80
        %v1171 = vpop.permute.xlu0 %1170
        %1172 = vrot.lane.b32.xlu0 %v1164, 80
        %v1173 = vpop.permute.xlu0 %1172
        %v1174 = vsel %vm537, %v1169, %v1171
        %v1175 = vsel %vm537, %v1171, %v1173
        %v1179 = vadd.f32 %v1145, %v1174
        %v1180 = vadd.f32 %v1146, %v1175
        %v1181 = vadd.f32 %v1147, %v1173
        %1182 = vset.pattern.permute.xlu0 4
        %1183 = vperm.xlu0 %1182, %v880
        %v1184 = vpop.permute.xlu0 %1183
        %v1186 = vmul.f32 %v1184, %v472
        %v1187 = vmul.f32 %v1184, %v473
        %v1188 = vmul.f32 %v1184, %v474
        %1192 = vrot.lane.b32.xlu0 %v1186, 112
        %v1193 = vpop.permute.xlu0 %1192
        %1194 = vrot.lane.b32.xlu0 %v1187, 112
        %v1195 = vpop.permute.xlu0 %1194
        %1196 = vrot.lane.b32.xlu0 %v1188, 112
        %v1197 = vpop.permute.xlu0 %1196
        %v1198 = vsel %vm491, %v1193, %v1195
        %v1199 = vsel %vm491, %v1195, %v1197
        %v1203 = vadd.f32 %v1155, %v1198
        %v1204 = vadd.f32 %v1156, %v1199
        %v1205 = vadd.f32 %v1157, %v1197
        %1206 = vset.pattern.permute.xlu0 31
        %1207 = vperm.xlu0 %1206, %v462
        %v1208 = vpop.permute.xlu0 %1207
        %v1210 = vmul.f32 %v1208, %v472
        %v1211 = vmul.f32 %v1208, %v473
        %v1212 = vmul.f32 %v1208, %v474
        %1216 = vrot.lane.b32.xlu0 %v1210, 64
        %v1217 = vpop.permute.xlu0 %1216
        %1218 = vrot.lane.b32.xlu0 %v1211, 64
        %v1219 = vpop.permute.xlu0 %1218
        %1220 = vrot.lane.b32.xlu0 %v1212, 64
        %v1221 = vpop.permute.xlu0 %1220
        %v1222 = vsel %vm560, %v1217, %v1219
        %v1223 = vsel %vm560, %v1219, %v1221
        %v1227 = vadd.f32 %v1179, %v1222
        %v1228 = vadd.f32 %v1180, %v1223
        %v1229 = vadd.f32 %v1181, %v1221
        %1230 = vset.pattern.permute.xlu0 7
        %1231 = vperm.xlu0 %1230, %v880
        %v1232 = vpop.permute.xlu0 %1231
        %v1234 = vmul.f32 %v1232, %v472
        %v1235 = vmul.f32 %v1232, %v473
        %v1236 = vmul.f32 %v1232, %v474
        %1240 = vrot.lane.b32.xlu0 %v1234, 96
        %v1241 = vpop.permute.xlu0 %1240
        %1242 = vrot.lane.b32.xlu0 %v1235, 96
        %v1243 = vpop.permute.xlu0 %1242
        %1244 = vrot.lane.b32.xlu0 %v1236, 96
        %v1245 = vpop.permute.xlu0 %1244
        %v1246 = vsel %vm514, %v1241, %v1243
        %v1247 = vsel %vm514, %v1243, %v1245
        %v1251 = vadd.f32 %v1203, %v1246
        %v1252 = vadd.f32 %v1204, %v1247
        %v1253 = vadd.f32 %v1205, %v1245
        %1254 = vset.pattern.permute.xlu0 38
        %1255 = vperm.xlu0 %1254, %v462
        %v1256 = vpop.permute.xlu0 %1255
        %v1258 = vmul.f32 %v1256, %v472
        %v1259 = vmul.f32 %v1256, %v473
        %v1260 = vmul.f32 %v1256, %v474
        %1264 = vrot.lane.b32.xlu0 %v1258, 48
        %v1265 = vpop.permute.xlu0 %1264
        %1266 = vrot.lane.b32.xlu0 %v1259, 48
        %v1267 = vpop.permute.xlu0 %1266
        %1268 = vrot.lane.b32.xlu0 %v1260, 48
        %v1269 = vpop.permute.xlu0 %1268
        %v1270 = vsel %vm583, %v1265, %v1267
        %v1271 = vsel %vm583, %v1267, %v1269
        %v1275 = vadd.f32 %v1227, %v1270
        %v1276 = vadd.f32 %v1228, %v1271
        %v1277 = vadd.f32 %v1229, %v1269
        %1278 = vset.pattern.permute.xlu0 45
        %1279 = vperm.xlu0 %1278, %v462
        %v1280 = vpop.permute.xlu0 %1279
        %v1282 = vmul.f32 %v1280, %v472
        %v1283 = vmul.f32 %v1280, %v473
        %v1284 = vmul.f32 %v1280, %v474
        %1288 = vrot.lane.b32.xlu0 %v1282, 32
        %v1289 = vpop.permute.xlu0 %1288
        %1290 = vrot.lane.b32.xlu0 %v1283, 32
        %v1291 = vpop.permute.xlu0 %1290
        %1292 = vrot.lane.b32.xlu0 %v1284, 32
        %v1293 = vpop.permute.xlu0 %1292
        %v1294 = vsel %vm606, %v1289, %v1291
        %v1295 = vsel %vm606, %v1291, %v1293
        %v1299 = vadd.f32 %v1275, %v1294
        %v1300 = vadd.f32 %v1276, %v1295
        %v1301 = vadd.f32 %v1277, %v1293
        %1305 = vrot.lane.b32.xlu0 %v1299, 125
        %v1306 = vpop.permute.xlu0 %1305
        %1307 = vrot.lane.b32.xlu0 %v1300, 125
        %v1308 = vpop.permute.xlu0 %1307
        %1309 = vrot.lane.b32.xlu0 %v1301, 125
        %v1310 = vpop.permute.xlu0 %1309
        %vm1311 = vcmask 1022976
        %v1312 = vsel %vm1311, %v1306, %v1308
        %v1313 = vsel %vm1311, %v1308, %v1310
        %v1316 = vadd.f32 %v1073, %v1312
        %v1317 = vadd.f32 %v1074, %v1313
        %1321 = vrot.lane.b32.xlu0 %v1251, 127
        %v1322 = vpop.permute.xlu0 %1321
        %1323 = vrot.lane.b32.xlu0 %v1252, 127
        %v1324 = vpop.permute.xlu0 %1323
        %1325 = vrot.lane.b32.xlu0 %v1253, 127
        %v1326 = vpop.permute.xlu0 %1325
        %v1327 = vsel %vm815, %v1322, %v1324
        %v1328 = vsel %vm815, %v1324, %v1326
        %v1332 = vadd.f32 %v1087, %v1327
        %v1333 = vadd.f32 %v1088, %v1328
        %v1334 = vadd.f32 %v1089, %v1326
        %1335 = vset.pattern.permute.xlu0 4
        %1336 = vperm.xlu0 %1335, %v462
        %v1337 = vpop.permute.xlu0 %1336
        %v1339 = vmul.f32 %v1337, %v472
        %v1340 = vmul.f32 %v1337, %v473
        %v1341 = vmul.f32 %v1337, %v474
        %v1342 = vadd.f32 %v1339, 0.0
        %v1343 = vadd.f32 %v1340, 0.0
        %v1344 = vadd.f32 %v1341, 0.0
        %1345 = vset.pattern.permute.xlu0 11
        %1346 = vperm.xlu0 %1345, %v462
        %v1347 = vpop.permute.xlu0 %1346
        %v1349 = vmul.f32 %v1347, %v472
        %v1350 = vmul.f32 %v1347, %v473
        %v1351 = vmul.f32 %v1347, %v474
        %1355 = vrot.lane.b32.xlu0 %v1349, 112
        %v1356 = vpop.permute.xlu0 %1355
        %1357 = vrot.lane.b32.xlu0 %v1350, 112
        %v1358 = vpop.permute.xlu0 %1357
        %1359 = vrot.lane.b32.xlu0 %v1351, 112
        %v1360 = vpop.permute.xlu0 %1359
        %v1361 = vsel %vm491, %v1356, %v1358
        %v1362 = vsel %vm491, %v1358, %v1360
        %v1366 = vadd.f32 %v1342, %v1361
        %v1367 = vadd.f32 %v1343, %v1362
        %v1368 = vadd.f32 %v1344, %v1360
        %1369 = vset.pattern.permute.xlu0 18
        %1370 = vperm.xlu0 %1369, %v462
        %v1371 = vpop.permute.xlu0 %1370
        %v1373 = vmul.f32 %v1371, %v472
        %v1374 = vmul.f32 %v1371, %v473
        %v1375 = vmul.f32 %v1371, %v474
        %1379 = vrot.lane.b32.xlu0 %v1373, 96
        %v1380 = vpop.permute.xlu0 %1379
        %1381 = vrot.lane.b32.xlu0 %v1374, 96
        %v1382 = vpop.permute.xlu0 %1381
        %1383 = vrot.lane.b32.xlu0 %v1375, 96
        %v1384 = vpop.permute.xlu0 %1383
        %v1385 = vsel %vm514, %v1380, %v1382
        %v1386 = vsel %vm514, %v1382, %v1384
        %v1390 = vadd.f32 %v1366, %v1385
        %v1391 = vadd.f32 %v1367, %v1386
        %v1392 = vadd.f32 %v1368, %v1384
        %1393 = vset.pattern.permute.xlu0 2
        %1394 = vperm.xlu0 %1393, %v880
        %v1395 = vpop.permute.xlu0 %1394
        %v1397 = vmul.f32 %v1395, %v472
        %v1398 = vmul.f32 %v1395, %v473
        %v1399 = vmul.f32 %v1395, %v474
        %v1400 = vadd.f32 %v1397, 0.0
        %v1401 = vadd.f32 %v1398, 0.0
        %v1402 = vadd.f32 %v1399, 0.0
        %1403 = vset.pattern.permute.xlu0 25
        %1404 = vperm.xlu0 %1403, %v462
        %v1405 = vpop.permute.xlu0 %1404
        %v1407 = vmul.f32 %v1405, %v472
        %v1408 = vmul.f32 %v1405, %v473
        %v1409 = vmul.f32 %v1405, %v474
        %1413 = vrot.lane.b32.xlu0 %v1407, 80
        %v1414 = vpop.permute.xlu0 %1413
        %1415 = vrot.lane.b32.xlu0 %v1408, 80
        %v1416 = vpop.permute.xlu0 %1415
        %1417 = vrot.lane.b32.xlu0 %v1409, 80
        %v1418 = vpop.permute.xlu0 %1417
        %v1419 = vsel %vm537, %v1414, %v1416
        %v1420 = vsel %vm537, %v1416, %v1418
        %v1424 = vadd.f32 %v1390, %v1419
        %v1425 = vadd.f32 %v1391, %v1420
        %v1426 = vadd.f32 %v1392, %v1418
        %1427 = vset.pattern.permute.xlu0 5
        %1428 = vperm.xlu0 %1427, %v880
        %v1429 = vpop.permute.xlu0 %1428
        %v1431 = vmul.f32 %v1429, %v472
        %v1432 = vmul.f32 %v1429, %v473
        %v1433 = vmul.f32 %v1429, %v474
        %1437 = vrot.lane.b32.xlu0 %v1431, 112
        %v1438 = vpop.permute.xlu0 %1437
        %1439 = vrot.lane.b32.xlu0 %v1432, 112
        %v1440 = vpop.permute.xlu0 %1439
        %1441 = vrot.lane.b32.xlu0 %v1433, 112
        %v1442 = vpop.permute.xlu0 %1441
        %v1443 = vsel %vm491, %v1438, %v1440
        %v1444 = vsel %vm491, %v1440, %v1442
        %v1448 = vadd.f32 %v1400, %v1443
        %v1449 = vadd.f32 %v1401, %v1444
        %v1450 = vadd.f32 %v1402, %v1442
        %1451 = vset.pattern.permute.xlu0 32
        %1452 = vperm.xlu0 %1451, %v462
        %v1453 = vpop.permute.xlu0 %1452
        %v1455 = vmul.f32 %v1453, %v472
        %v1456 = vmul.f32 %v1453, %v473
        %v1457 = vmul.f32 %v1453, %v474
        %1461 = vrot.lane.b32.xlu0 %v1455, 64
        %v1462 = vpop.permute.xlu0 %1461
        %1463 = vrot.lane.b32.xlu0 %v1456, 64
        %v1464 = vpop.permute.xlu0 %1463
        %1465 = vrot.lane.b32.xlu0 %v1457, 64
        %v1466 = vpop.permute.xlu0 %1465
        %v1467 = vsel %vm560, %v1462, %v1464
        %v1468 = vsel %vm560, %v1464, %v1466
        %v1472 = vadd.f32 %v1424, %v1467
        %v1473 = vadd.f32 %v1425, %v1468
        %v1474 = vadd.f32 %v1426, %v1466
        %1475 = vset.pattern.permute.xlu0 8
        %1476 = vperm.xlu0 %1475, %v880
        %v1477 = vpop.permute.xlu0 %1476
        %v1479 = vmul.f32 %v1477, %v472
        %v1480 = vmul.f32 %v1477, %v473
        %v1481 = vmul.f32 %v1477, %v474
        %1485 = vrot.lane.b32.xlu0 %v1479, 96
        %v1486 = vpop.permute.xlu0 %1485
        %1487 = vrot.lane.b32.xlu0 %v1480, 96
        %v1488 = vpop.permute.xlu0 %1487
        %1489 = vrot.lane.b32.xlu0 %v1481, 96
        %v1490 = vpop.permute.xlu0 %1489
        %v1491 = vsel %vm514, %v1486, %v1488
        %v1492 = vsel %vm514, %v1488, %v1490
        %v1496 = vadd.f32 %v1448, %v1491
        %v1497 = vadd.f32 %v1449, %v1492
        %v1498 = vadd.f32 %v1450, %v1490
        %1499 = vset.pattern.permute.xlu0 39
        %1500 = vperm.xlu0 %1499, %v462
        %v1501 = vpop.permute.xlu0 %1500
        %v1503 = vmul.f32 %v1501, %v472
        %v1504 = vmul.f32 %v1501, %v473
        %v1505 = vmul.f32 %v1501, %v474
        %1509 = vrot.lane.b32.xlu0 %v1503, 48
        %v1510 = vpop.permute.xlu0 %1509
        %1511 = vrot.lane.b32.xlu0 %v1504, 48
        %v1512 = vpop.permute.xlu0 %1511
        %1513 = vrot.lane.b32.xlu0 %v1505, 48
        %v1514 = vpop.permute.xlu0 %1513
        %v1515 = vsel %vm583, %v1510, %v1512
        %v1516 = vsel %vm583, %v1512, %v1514
        %v1520 = vadd.f32 %v1472, %v1515
        %v1521 = vadd.f32 %v1473, %v1516
        %v1522 = vadd.f32 %v1474, %v1514
        %1523 = vset.pattern.permute.xlu0 46
        %1524 = vperm.xlu0 %1523, %v462
        %v1525 = vpop.permute.xlu0 %1524
        %v1527 = vmul.f32 %v1525, %v472
        %v1528 = vmul.f32 %v1525, %v473
        %v1529 = vmul.f32 %v1525, %v474
        %1533 = vrot.lane.b32.xlu0 %v1527, 32
        %v1534 = vpop.permute.xlu0 %1533
        %1535 = vrot.lane.b32.xlu0 %v1528, 32
        %v1536 = vpop.permute.xlu0 %1535
        %1537 = vrot.lane.b32.xlu0 %v1529, 32
        %v1538 = vpop.permute.xlu0 %1537
        %v1539 = vsel %vm606, %v1534, %v1536
        %v1540 = vsel %vm606, %v1536, %v1538
        %v1544 = vadd.f32 %v1520, %v1539
        %v1545 = vadd.f32 %v1521, %v1540
        %v1546 = vadd.f32 %v1522, %v1538
        %s1547 = scalar_lea.vmem %s1, 4
        %v1548 = vld [vmem:[%s1547] ss:$8 sm:$0x3]
        %v1550 = vlaneseq
        %v1551 = vshrl.u32 %v1550, 7
        %v1552 = vsub.s32 0, %v1551
        %v1553 = vrot.slane %v1548, %v1552
        %v1554 = vlaneseq
        %v1555 = vshrl.u32 %v1554, 7
        %v1556 = vsub.s32 1, %v1555
        %v1557 = vrot.slane %v1548, %v1556
        %1558 = vrot.lane.b32.xlu0 %v1553, 4
        %v1559 = vpop.permute.xlu0 %1558
        %1560 = vrot.lane.b32.xlu0 %v1557, 4
        %v1561 = vpop.permute.xlu0 %1560
        %vm1562 = vcmask 31744
        %v1563 = vsel %vm1562, %v1559, %v1561
        %v1567 = vmul.f32 %v1544, %v1559
        %v1568 = vmul.f32 %v1545, %v1563
        %v1569 = vmul.f32 %v1546, %v1561
        %1573 = vrot.lane.b32.xlu0 %v1567, 124
        %v1574 = vpop.permute.xlu0 %1573
        %1575 = vrot.lane.b32.xlu0 %v1568, 124
        %v1576 = vpop.permute.xlu0 %1575
        %1577 = vrot.lane.b32.xlu0 %v1569, 124
        %v1578 = vpop.permute.xlu0 %1577
        %vm1579 = vcmask 1014784
        %v1580 = vsel %vm1579, %v1574, %v1576
        %v1581 = vsel %vm1579, %v1576, %v1578
        %v1584 = vadd.f32 %v1316, %v1580
        %v1585 = vadd.f32 %v1317, %v1581
        %1586 = vrot.lane.b32.xlu0 %v1553, 36
        %v1587 = vpop.permute.xlu0 %1586
        %1588 = vrot.lane.b32.xlu0 %v1557, 36
        %v1589 = vpop.permute.xlu0 %1588
        %vm1590 = vcmask 293888
        %v1591 = vsel %vm1590, %v1587, %v1589
        %v1595 = vmul.f32 %v1496, %v1587
        %v1596 = vmul.f32 %v1497, %v1591
        %v1597 = vmul.f32 %v1498, %v1589
        %1601 = vrot.lane.b32.xlu0 %v1595, 126
        %v1602 = vpop.permute.xlu0 %1601
        %1603 = vrot.lane.b32.xlu0 %v1596, 126
        %v1604 = vpop.permute.xlu0 %1603
        %1605 = vrot.lane.b32.xlu0 %v1597, 126
        %v1606 = vpop.permute.xlu0 %1605
        %v1607 = vsel %vm1068, %v1602, %v1604
        %v1608 = vsel %vm1068, %v1604, %v1606
        %v1612 = vadd.f32 %v1332, %v1607
        %v1613 = vadd.f32 %v1333, %v1608
        %v1614 = vadd.f32 %v1334, %v1606
        %1615 = vset.pattern.permute.xlu0 5
        %1616 = vperm.xlu0 %1615, %v462
        %v1617 = vpop.permute.xlu0 %1616
        %v1619 = vmul.f32 %v1617, %v472
        %v1620 = vmul.f32 %v1617, %v473
        %v1621 = vmul.f32 %v1617, %v474
        %v1622 = vadd.f32 %v1619, 0.0
        %v1623 = vadd.f32 %v1620, 0.0
        %v1624 = vadd.f32 %v1621, 0.0
        %1625 = vset.pattern.permute.xlu0 12
        %1626 = vperm.xlu0 %1625, %v462
        %v1627 = vpop.permute.xlu0 %1626
        %v1629 = vmul.f32 %v1627, %v472
        %v1630 = vmul.f32 %v1627, %v473
        %v1631 = vmul.f32 %v1627, %v474
        %1635 = vrot.lane.b32.xlu0 %v1629, 112
        %v1636 = vpop.permute.xlu0 %1635
        %1637 = vrot.lane.b32.xlu0 %v1630, 112
        %v1638 = vpop.permute.xlu0 %1637
        %1639 = vrot.lane.b32.xlu0 %v1631, 112
        %v1640 = vpop.permute.xlu0 %1639
        %v1641 = vsel %vm491, %v1636, %v1638
        %v1642 = vsel %vm491, %v1638, %v1640
        %v1646 = vadd.f32 %v1622, %v1641
        %v1647 = vadd.f32 %v1623, %v1642
        %v1648 = vadd.f32 %v1624, %v1640
        %1649 = vset.pattern.permute.xlu0 19
        %1650 = vperm.xlu0 %1649, %v462
        %v1651 = vpop.permute.xlu0 %1650
        %v1653 = vmul.f32 %v1651, %v472
        %v1654 = vmul.f32 %v1651, %v473
        %v1655 = vmul.f32 %v1651, %v474
        %1659 = vrot.lane.b32.xlu0 %v1653, 96
        %v1660 = vpop.permute.xlu0 %1659
        %1661 = vrot.lane.b32.xlu0 %v1654, 96
        %v1662 = vpop.permute.xlu0 %1661
        %1663 = vrot.lane.b32.xlu0 %v1655, 96
        %v1664 = vpop.permute.xlu0 %1663
        %v1665 = vsel %vm514, %v1660, %v1662
        %v1666 = vsel %vm514, %v1662, %v1664
        %v1670 = vadd.f32 %v1646, %v1665
        %v1671 = vadd.f32 %v1647, %v1666
        %v1672 = vadd.f32 %v1648, %v1664
        %1673 = vset.pattern.permute.xlu0 26
        %1674 = vperm.xlu0 %1673, %v462
        %v1675 = vpop.permute.xlu0 %1674
        %v1677 = vmul.f32 %v1675, %v472
        %v1678 = vmul.f32 %v1675, %v473
        %v1679 = vmul.f32 %v1675, %v474
        %1683 = vrot.lane.b32.xlu0 %v1677, 80
        %v1684 = vpop.permute.xlu0 %1683
        %1685 = vrot.lane.b32.xlu0 %v1678, 80
        %v1686 = vpop.permute.xlu0 %1685
        %1687 = vrot.lane.b32.xlu0 %v1679, 80
        %v1688 = vpop.permute.xlu0 %1687
        %v1689 = vsel %vm537, %v1684, %v1686
        %v1690 = vsel %vm537, %v1686, %v1688
        %v1694 = vadd.f32 %v1670, %v1689
        %v1695 = vadd.f32 %v1671, %v1690
        %v1696 = vadd.f32 %v1672, %v1688
        %1697 = vset.pattern.permute.xlu0 33
        %1698 = vperm.xlu0 %1697, %v462
        %v1699 = vpop.permute.xlu0 %1698
        %v1701 = vmul.f32 %v1699, %v472
        %v1702 = vmul.f32 %v1699, %v473
        %v1703 = vmul.f32 %v1699, %v474
        %1707 = vrot.lane.b32.xlu0 %v1701, 64
        %v1708 = vpop.permute.xlu0 %1707
        %1709 = vrot.lane.b32.xlu0 %v1702, 64
        %v1710 = vpop.permute.xlu0 %1709
        %1711 = vrot.lane.b32.xlu0 %v1703, 64
        %v1712 = vpop.permute.xlu0 %1711
        %v1713 = vsel %vm560, %v1708, %v1710
        %v1714 = vsel %vm560, %v1710, %v1712
        %v1718 = vadd.f32 %v1694, %v1713
        %v1719 = vadd.f32 %v1695, %v1714
        %v1720 = vadd.f32 %v1696, %v1712
        %1721 = vset.pattern.permute.xlu0 40
        %1722 = vperm.xlu0 %1721, %v462
        %v1723 = vpop.permute.xlu0 %1722
        %v1725 = vmul.f32 %v1723, %v472
        %v1726 = vmul.f32 %v1723, %v473
        %v1727 = vmul.f32 %v1723, %v474
        %1731 = vrot.lane.b32.xlu0 %v1725, 48
        %v1732 = vpop.permute.xlu0 %1731
        %1733 = vrot.lane.b32.xlu0 %v1726, 48
        %v1734 = vpop.permute.xlu0 %1733
        %1735 = vrot.lane.b32.xlu0 %v1727, 48
        %v1736 = vpop.permute.xlu0 %1735
        %v1737 = vsel %vm583, %v1732, %v1734
        %v1738 = vsel %vm583, %v1734, %v1736
        %v1742 = vadd.f32 %v1718, %v1737
        %v1743 = vadd.f32 %v1719, %v1738
        %v1744 = vadd.f32 %v1720, %v1736
        %1745 = vset.pattern.permute.xlu0 47
        %1746 = vperm.xlu0 %1745, %v462
        %v1747 = vpop.permute.xlu0 %1746
        %v1749 = vmul.f32 %v1747, %v472
        %v1750 = vmul.f32 %v1747, %v473
        %v1751 = vmul.f32 %v1747, %v474
        %1755 = vrot.lane.b32.xlu0 %v1749, 32
        %v1756 = vpop.permute.xlu0 %1755
        %1757 = vrot.lane.b32.xlu0 %v1750, 32
        %v1758 = vpop.permute.xlu0 %1757
        %1759 = vrot.lane.b32.xlu0 %v1751, 32
        %v1760 = vpop.permute.xlu0 %1759
        %v1761 = vsel %vm606, %v1756, %v1758
        %v1762 = vsel %vm606, %v1758, %v1760
        %v1766 = vadd.f32 %v1742, %v1761
        %v1767 = vadd.f32 %v1743, %v1762
        %v1768 = vadd.f32 %v1744, %v1760
        %s1769 = scalar_lea.vmem %s1, 5
        %v1770 = vld [vmem:[%s1769] ss:$8 sm:$0x3]
        %v1772 = vlaneseq
        %v1773 = vshrl.u32 %v1772, 7
        %v1774 = vsub.s32 0, %v1773
        %v1775 = vrot.slane %v1770, %v1774
        %v1776 = vlaneseq
        %v1777 = vshrl.u32 %v1776, 7
        %v1778 = vsub.s32 1, %v1777
        %v1779 = vrot.slane %v1770, %v1778
        %1780 = vrot.lane.b32.xlu0 %v1775, 5
        %v1781 = vpop.permute.xlu0 %1780
        %1782 = vrot.lane.b32.xlu0 %v1779, 5
        %v1783 = vpop.permute.xlu0 %1782
        %vm1784 = vcmask 39936
        %v1785 = vsel %vm1784, %v1781, %v1783
        %v1789 = vmul.f32 %v1766, %v1781
        %v1790 = vmul.f32 %v1767, %v1785
        %v1791 = vmul.f32 %v1768, %v1783
        %1795 = vrot.lane.b32.xlu0 %v1789, 123
        %v1796 = vpop.permute.xlu0 %1795
        %1797 = vrot.lane.b32.xlu0 %v1790, 123
        %v1798 = vpop.permute.xlu0 %1797
        %1799 = vrot.lane.b32.xlu0 %v1791, 123
        %v1800 = vpop.permute.xlu0 %1799
        %vm1801 = vcmask 1006592
        %v1802 = vsel %vm1801, %v1796, %v1798
        %v1803 = vsel %vm1801, %v1798, %v1800
        %v1806 = vadd.f32 %v1584, %v1802
        %v1807 = vadd.f32 %v1585, %v1803
        %1808 = vset.pattern.permute.xlu0 6
        %1809 = vperm.xlu0 %1808, %v462
        %v1810 = vpop.permute.xlu0 %1809
        %v1812 = vmul.f32 %v1810, %v472
        %v1813 = vmul.f32 %v1810, %v473
        %v1814 = vmul.f32 %v1810, %v474
        %v1815 = vadd.f32 %v1812, 0.0
        %v1816 = vadd.f32 %v1813, 0.0
        %v1817 = vadd.f32 %v1814, 0.0
        %1818 = vset.pattern.permute.xlu0 13
        %1819 = vperm.xlu0 %1818, %v462
        %v1820 = vpop.permute.xlu0 %1819
        %v1822 = vmul.f32 %v1820, %v472
        %v1823 = vmul.f32 %v1820, %v473
        %v1824 = vmul.f32 %v1820, %v474
        %1828 = vrot.lane.b32.xlu0 %v1822, 112
        %v1829 = vpop.permute.xlu0 %1828
        %1830 = vrot.lane.b32.xlu0 %v1823, 112
        %v1831 = vpop.permute.xlu0 %1830
        %1832 = vrot.lane.b32.xlu0 %v1824, 112
        %v1833 = vpop.permute.xlu0 %1832
        %v1834 = vsel %vm491, %v1829, %v1831
        %v1835 = vsel %vm491, %v1831, %v1833
        %v1839 = vadd.f32 %v1815, %v1834
        %v1840 = vadd.f32 %v1816, %v1835
        %v1841 = vadd.f32 %v1817, %v1833
        %1842 = vset.pattern.permute.xlu0 20
        %1843 = vperm.xlu0 %1842, %v462
        %v1844 = vpop.permute.xlu0 %1843
        %v1846 = vmul.f32 %v1844, %v472
        %v1847 = vmul.f32 %v1844, %v473
        %v1848 = vmul.f32 %v1844, %v474
        %1852 = vrot.lane.b32.xlu0 %v1846, 96
        %v1853 = vpop.permute.xlu0 %1852
        %1854 = vrot.lane.b32.xlu0 %v1847, 96
        %v1855 = vpop.permute.xlu0 %1854
        %1856 = vrot.lane.b32.xlu0 %v1848, 96
        %v1857 = vpop.permute.xlu0 %1856
        %v1858 = vsel %vm514, %v1853, %v1855
        %v1859 = vsel %vm514, %v1855, %v1857
        %v1863 = vadd.f32 %v1839, %v1858
        %v1864 = vadd.f32 %v1840, %v1859
        %v1865 = vadd.f32 %v1841, %v1857
        %1866 = vset.pattern.permute.xlu0 27
        %1867 = vperm.xlu0 %1866, %v462
        %v1868 = vpop.permute.xlu0 %1867
        %v1870 = vmul.f32 %v1868, %v472
        %v1871 = vmul.f32 %v1868, %v473
        %v1872 = vmul.f32 %v1868, %v474
        %1876 = vrot.lane.b32.xlu0 %v1870, 80
        %v1877 = vpop.permute.xlu0 %1876
        %1878 = vrot.lane.b32.xlu0 %v1871, 80
        %v1879 = vpop.permute.xlu0 %1878
        %1880 = vrot.lane.b32.xlu0 %v1872, 80
        %v1881 = vpop.permute.xlu0 %1880
        %v1882 = vsel %vm537, %v1877, %v1879
        %v1883 = vsel %vm537, %v1879, %v1881
        %v1887 = vadd.f32 %v1863, %v1882
        %v1888 = vadd.f32 %v1864, %v1883
        %v1889 = vadd.f32 %v1865, %v1881
        %1890 = vset.pattern.permute.xlu0 34
        %1891 = vperm.xlu0 %1890, %v462
        %v1892 = vpop.permute.xlu0 %1891
        %v1894 = vmul.f32 %v1892, %v472
        %v1895 = vmul.f32 %v1892, %v473
        %v1896 = vmul.f32 %v1892, %v474
        %1900 = vrot.lane.b32.xlu0 %v1894, 64
        %v1901 = vpop.permute.xlu0 %1900
        %1902 = vrot.lane.b32.xlu0 %v1895, 64
        %v1903 = vpop.permute.xlu0 %1902
        %1904 = vrot.lane.b32.xlu0 %v1896, 64
        %v1905 = vpop.permute.xlu0 %1904
        %v1906 = vsel %vm560, %v1901, %v1903
        %v1907 = vsel %vm560, %v1903, %v1905
        %v1911 = vadd.f32 %v1887, %v1906
        %v1912 = vadd.f32 %v1888, %v1907
        %v1913 = vadd.f32 %v1889, %v1905
        %1914 = vset.pattern.permute.xlu0 41
        %1915 = vperm.xlu0 %1914, %v462
        %v1916 = vpop.permute.xlu0 %1915
        %v1918 = vmul.f32 %v1916, %v472
        %v1919 = vmul.f32 %v1916, %v473
        %v1920 = vmul.f32 %v1916, %v474
        %1924 = vrot.lane.b32.xlu0 %v1918, 48
        %v1925 = vpop.permute.xlu0 %1924
        %1926 = vrot.lane.b32.xlu0 %v1919, 48
        %v1927 = vpop.permute.xlu0 %1926
        %1928 = vrot.lane.b32.xlu0 %v1920, 48
        %v1929 = vpop.permute.xlu0 %1928
        %v1930 = vsel %vm583, %v1925, %v1927
        %v1931 = vsel %vm583, %v1927, %v1929
        %v1935 = vadd.f32 %v1911, %v1930
        %v1936 = vadd.f32 %v1912, %v1931
        %v1937 = vadd.f32 %v1913, %v1929
        %1938 = vset.pattern.permute.xlu0 48
        %1939 = vperm.xlu0 %1938, %v462
        %v1940 = vpop.permute.xlu0 %1939
        %v1942 = vmul.f32 %v1940, %v472
        %v1943 = vmul.f32 %v1940, %v473
        %v1944 = vmul.f32 %v1940, %v474
        %1948 = vrot.lane.b32.xlu0 %v1942, 32
        %v1949 = vpop.permute.xlu0 %1948
        %1950 = vrot.lane.b32.xlu0 %v1943, 32
        %v1951 = vpop.permute.xlu0 %1950
        %1952 = vrot.lane.b32.xlu0 %v1944, 32
        %v1953 = vpop.permute.xlu0 %1952
        %v1954 = vsel %vm606, %v1949, %v1951
        %v1955 = vsel %vm606, %v1951, %v1953
        %v1959 = vadd.f32 %v1935, %v1954
        %v1960 = vadd.f32 %v1936, %v1955
        %v1961 = vadd.f32 %v1937, %v1953
        %s1962 = scalar_lea.vmem %s1, 6
        %v1963 = vld [vmem:[%s1962] ss:$8 sm:$0x3]
        %v1965 = vlaneseq
        %v1966 = vshrl.u32 %v1965, 7
        %v1967 = vsub.s32 0, %v1966
        %v1968 = vrot.slane %v1963, %v1967
        %v1969 = vlaneseq
        %v1970 = vshrl.u32 %v1969, 7
        %v1971 = vsub.s32 1, %v1970
        %v1972 = vrot.slane %v1963, %v1971
        %1973 = vrot.lane.b32.xlu0 %v1968, 6
        %v1974 = vpop.permute.xlu0 %1973
        %1975 = vrot.lane.b32.xlu0 %v1972, 6
        %v1976 = vpop.permute.xlu0 %1975
        %vm1977 = vcmask 48128
        %v1978 = vsel %vm1977, %v1974, %v1976
        %v1982 = vmul.f32 %v1959, %v1974
        %v1983 = vmul.f32 %v1960, %v1978
        %v1984 = vmul.f32 %v1961, %v1976
        %1988 = vrot.lane.b32.xlu0 %v1982, 122
        %v1989 = vpop.permute.xlu0 %1988
        %1990 = vrot.lane.b32.xlu0 %v1983, 122
        %v1991 = vpop.permute.xlu0 %1990
        %1992 = vrot.lane.b32.xlu0 %v1984, 122
        %v1993 = vpop.permute.xlu0 %1992
        %vm1994 = vcmask 998400
        %v1995 = vsel %vm1994, %v1989, %v1991
        %v1996 = vsel %vm1994, %v1991, %v1993
        %v1999 = vadd.f32 %v1806, %v1995
        %v2000 = vadd.f32 %v1807, %v1996
        %v2001 = vld [vmem:[%s11] sm:$0xff]
        %v2002 = vld [vmem:[%s3] sm:$0xff]
        %2004 = vset.pattern.permute.xlu0 0
        %2005 = vperm.xlu0 %2004, %v2002
        %v2006 = vpop.permute.xlu0 %2005
        %v2008 = vmul.f32 %v2006, %v440
        %v2009 = vmul.f32 %v2006, %v441
        %2012 = vrot.lane.b32.xlu0 %v2008, 34
        %v2013 = vpop.permute.xlu0 %2012
        %2014 = vrot.lane.b32.xlu0 %v2009, 34
        %v2015 = vpop.permute.xlu0 %2014
        %v2016 = vsel %vm1079, %v2013, %v2015
        %v2020 = vadd.f32 %v1612, %v2013
        %v2021 = vadd.f32 %v1613, %v2016
        %v2022 = vadd.f32 %v1614, %v2015
        %v2023 = vld [vmem:[%s4] sm:$0xff]
        %2025 = vset.pattern.permute.xlu0 0
        %2026 = vperm.xlu0 %2025, %v2023
        %v2027 = vpop.permute.xlu0 %2026
        %v2029 = vadd.f32 %v2020, %v2027
        %v2030 = vadd.f32 %v2021, %v2027
        %v2031 = vadd.f32 %v2022, %v2027
        %2033 = vset.pattern.permute.xlu0 0
        %2034 = vperm.xlu0 %2033, %v2001
        %v2035 = vpop.permute.xlu0 %2034
        %v2037 = vmul.f32 %v2035, %v2029
        %v2038 = vmul.f32 %v2035, %v2030
        %v2039 = vmul.f32 %v2035, %v2031
        %2043 = vrot.lane.b32.xlu0 %v2037, 94
        %v2044 = vpop.permute.xlu0 %2043
        %2045 = vrot.lane.b32.xlu0 %v2038, 94
        %v2046 = vpop.permute.xlu0 %2045
        %2047 = vrot.lane.b32.xlu0 %v2039, 94
        %v2048 = vpop.permute.xlu0 %2047
        %vm2049 = vcmask 769024
        %v2050 = vsel %vm2049, %v2044, %v2046
        %v2051 = vsel %vm2049, %v2046, %v2048
        %v2054 = vadd.f32 %v440, %v2050
        %v2055 = vadd.f32 %v441, %v2051
        %v2056 = vld [vmem:[%s6] sm:$0xff]
        %2058 = vset.pattern.permute.xlu0 0
        %2059 = vperm.xlu0 %2058, %v2056
        %v2060 = vpop.permute.xlu0 %2059
        %v2062 = vadd.f32 %v1999, %v2060
        %v2063 = vadd.f32 %v2000, %v2060
        %v2064 = vpack.c.bf16 %v2062, %v2062
        %v2065 = vpack.c.bf16 %v2063, %v2063
        %v2066 = vld [vmem:[%s7] sm:$0xf]
        %v2067 = vld [vmem:[%s7 + $0x4] sm:$0xf]
        %v2068 = vld [vmem:[%s7 + $0x8] sm:$0xf]
        %v2069 = vld [vmem:[%s7 + $0xc] sm:$0xf]
        %v2070 = vld [vmem:[%s8] sm:$0xff]
        %v2071 = vld [vmem:[%s8 + $0x8] sm:$0xff]
        %v2072 = vld [vmem:[%s8 + $0x10] sm:$0xff]
        %v2073 = vld [vmem:[%s8 + $0x18] sm:$0xff]
        %2075 = vset.pattern.permute.xlu0 0
        %2076 = vperm.xlu0 %2075, %v2070
        %v2077 = vpop.permute.xlu0 %2076
        %2080 = vset.pattern.permute.xlu0 0
        %2081 = vperm.xlu0 %2080, %v2071
        %v2082 = vpop.permute.xlu0 %2081
        %2085 = vset.pattern.permute.xlu0 0
        %2086 = vperm.xlu0 %2085, %v2072
        %v2087 = vpop.permute.xlu0 %2086
        %2090 = vset.pattern.permute.xlu0 0
        %2091 = vperm.xlu0 %2090, %v2073
        %v2092 = vpop.permute.xlu0 %2091
        %v2098 = vunpack.c.l.b16 %v2066
        %v2099 = vunpack.c.l.b16 %v2067
        %v2100 = vunpack.c.l.b16 %v2068
        %v2101 = vunpack.c.l.b16 %v2069
        %v2102 = vpack.c.b16 %v2099, %v2098
        %v2103 = vpack.c.b16 %v2101, %v2100
        %vm2104 = vcmask 64512
        %v2106 = vsel %vm2104, %v2102, 0
        %v2109 = vsel %vm2104, %v2103, 0
        %vm2111 = vcmask 1043456
        %v2113 = vsel %vm2111, %v2064, 0
        %v2116 = vsel %vm2111, %v2065, 0
        %2118 = vmatprep.subr.bf16.mxu0 0
        %2119 = vmatpush1.bf16.msra.mxu0 0
        %2120 = vmatprep.subr.bf16.mxu0 0
        %2121 = vmatpush1.bf16.msra.mxu0 0
        %2122 = vmatprep.subr.bf16.mxu0 0
        %2123 = vmatpush1.bf16.msra.mxu0 0
        %2124 = vmatprep.subr.bf16.mxu0 0
        %2125 = vmatpush1.bf16.msra.mxu0 0
        %2126 = vmatprep.subr.bf16.mxu0 0
        %2127 = vmatpush1.bf16.msra.mxu0 0
        %2128 = vmatprep.subr.bf16.mxu0 0
        %2129 = vmatpush1.bf16.msra.mxu0 0
        %2130 = vmatprep.subr.bf16.mxu0 0
        %2131 = vmatpush1.bf16.msra.mxu0 0
        %2132 = vmatprep.subr.bf16.mxu0 %v2116
        %2133 = vmatpush1.bf16.msra.mxu0 %v2113
        %2134 = vmatprep.subr.bf16.mxu0 0
        %2135 = vmatpush2.bf16.msra.mxu0 0
        %2136 = vmatprep.subr.bf16.mxu0 0
        %2137 = vmatpush2.bf16.msra.mxu0 0
        %2138 = vmatprep.subr.bf16.mxu0 0
        %2139 = vmatpush2.bf16.msra.mxu0 0
        %2140 = vmatprep.subr.bf16.mxu0 0
        %2141 = vmatpush2.bf16.msra.mxu0 0
        %2142 = vmatprep.subr.bf16.mxu0 0
        %2143 = vmatpush2.bf16.msra.mxu0 0
        %2144 = vmatprep.subr.bf16.mxu0 0
        %2145 = vmatpush2.bf16.msra.mxu0 0
        %2146 = vmatprep.subr.bf16.mxu0 0
        %2147 = vmatpush2.bf16.msra.mxu0 0
        %2148 = vmatprep.subr.bf16.mxu0 0
        %2149 = vmatpush2.bf16.msra.mxu0 0
        %2150 = vmatprep.mubr.bf16.mxu0 0
        %2151 = vmatmul.mubr.bf16.gmra.mxu0 %v2106
        %v2152 = vpop.f32.mrf.mxu0
        %v2153 = vadd.f32 %v2077, %v2152
        %v2154 = vpop.f32.mrf.mxu0
        %v2155 = vadd.f32 %v2077, %v2154
        %v2156 = vpop.f32.mrf.mxu0
        %v2157 = vadd.f32 %v2082, %v2156
        %v2158 = vpop.f32.mrf.mxu0
        %v2159 = vadd.f32 %v2082, %v2158
        %2160 = vmatprep.mubr.bf16.mxu0 0
        %2161 = vmatmul.mubr.bf16.gmra.mxu0 %v2109
        %v2162 = vpop.f32.mrf.mxu0
        %v2163 = vadd.f32 %v2087, %v2162
        %v2164 = vpop.f32.mrf.mxu0
        %v2165 = vadd.f32 %v2087, %v2164
        %v2166 = vpop.f32.mrf.mxu0
        %v2167 = vadd.f32 %v2092, %v2166
        %v2168 = vpop.f32.mrf.mxu0
        %v2169 = vadd.f32 %v2092, %v2168
        %2170 = vdwg.mxu0
        %v2171 = vmax.f32 %v2153, 0.0
        %v2172 = vmax.f32 %v2155, 0.0
        %v2173 = vmax.f32 %v2157, 0.0
        %v2174 = vmax.f32 %v2159, 0.0
        %v2175 = vmax.f32 %v2163, 0.0
        %v2176 = vmax.f32 %v2165, 0.0
        %v2177 = vmax.f32 %v2167, 0.0
        %v2178 = vmax.f32 %v2169, 0.0
        %v2179 = vpack.c.bf16 %v2173, %v2171
        %v2180 = vpack.c.bf16 %v2174, %v2172
        %v2181 = vpack.c.bf16 %v2177, %v2175
        %v2182 = vpack.c.bf16 %v2178, %v2176
        %v2183 = vld [vmem:[%s9] sm:$0xf]
        %v2184 = vld [vmem:[%s10] sm:$0xff]
        %2186 = vset.pattern.permute.xlu0 0
        %2187 = vperm.xlu0 %2186, %v2184
        %v2188 = vpop.permute.xlu0 %2187
        %v2191 = vsel %vm606, %v2183, 0
        %2193 = vmatprep.subr.bf16.mxu0 0
        %2194 = vmatpush1.bf16.msra.mxu0 0
        %2195 = vmatprep.subr.bf16.mxu0 0
        %2196 = vmatpush1.bf16.msra.mxu0 0
        %2197 = vmatprep.subr.bf16.mxu0 0
        %2198 = vmatpush1.bf16.msra.mxu0 0
        %2199 = vmatprep.subr.bf16.mxu0 0
        %2200 = vmatpush1.bf16.msra.mxu0 0
        %2201 = vmatprep.subr.bf16.mxu0 0
        %2202 = vmatpush1.bf16.msra.mxu0 0
        %2203 = vmatprep.subr.bf16.mxu0 0
        %2204 = vmatpush1.bf16.msra.mxu0 0
        %2205 = vmatprep.subr.bf16.mxu0 %v2182
        %2206 = vmatpush1.bf16.msra.mxu0 %v2181
        %2207 = vmatprep.subr.bf16.mxu0 %v2180
        %2208 = vmatpush1.bf16.msra.mxu0 %v2179
        %2209 = vmatprep.subr.bf16.mxu0 0
        %2210 = vmatpush2.bf16.msra.mxu0 0
        %2211 = vmatprep.subr.bf16.mxu0 0
        %2212 = vmatpush2.bf16.msra.mxu0 0
        %2213 = vmatprep.subr.bf16.mxu0 0
        %2214 = vmatpush2.bf16.msra.mxu0 0
        %2215 = vmatprep.subr.bf16.mxu0 0
        %2216 = vmatpush2.bf16.msra.mxu0 0
        %2217 = vmatprep.subr.bf16.mxu0 0
        %2218 = vmatpush2.bf16.msra.mxu0 0
        %2219 = vmatprep.subr.bf16.mxu0 0
        %2220 = vmatpush2.bf16.msra.mxu0 0
        %2221 = vmatprep.subr.bf16.mxu0 0
        %2222 = vmatpush2.bf16.msra.mxu0 0
        %2223 = vmatprep.subr.bf16.mxu0 0
        %2224 = vmatpush2.bf16.msra.mxu0 0
        %2225 = vmatprep.mubr.bf16.mxu0 0
        %2226 = vmatmul.mubr.bf16.gmra.mxu0 %v2191
        %v2227 = vpop.f32.mrf.mxu0
        %v2228 = vadd.f32 %v2188, %v2227
        %v2229 = vpop.f32.mrf.mxu0
        %v2230 = vadd.f32 %v2188, %v2229
        %v2231 = vpop.f32.mrf.mxu0
        %v2232 = vpop.f32.mrf.mxu0
        %2233 = vdwg.mxu0
        %v2234 = vld [vmem:[%s12] sm:$0xff]
        %2236 = vset.pattern.permute.xlu0 0
        %2237 = vperm.xlu0 %2236, %v2234
        %v2238 = vpop.permute.xlu0 %2237
        %v2240 = vmul.f32 %v2238, %v2228
        %v2241 = vmul.f32 %v2238, %v2230
        %v2242 = vadd.f32 %v2054, %v2240
        %v2243 = vadd.f32 %v2055, %v2241
        %2244 = vst [vmem:[%s433] sm:$0xff] %v2242
        %2245 = vst [vmem:[%s433 + $0x8] sm:$0xff] %v2243
        %s2246 = sand.u32 %s313, 1
        %s2247 = scalar_lea.sflag [#allocation4], %s2246
        %s2248 = sand.u32 %s313, 1
        %s2249 = smul.addr %s2248, 16
        %s2250 = scalar_lea.vmem [#allocation3], %s2249
        // Predicated region
        $region73: #{tpu_custom_call.1} parent=71 // pred_check
          %p2251 = pneg %p323
        $region74: #{tpu_custom_call.1} parent=71 // pred_check_branch
          %2253 = sbr.rel (%p2251) target = $region76
        $region75: #{tpu_custom_call.1} parent=71 // pred_region
          %s2255 = ssub.s32 256, 256
          %2256 = vsyncadd %s2247, %s2255
          %s2257 = smul.addr %s27, 2
          %s2258 = smul.addr %s2257, 128
          %s2259 = scalar_lea.hbm %s13, %s2258
          %s2261 = sshll.u32 %s2250, 4
          %s2262 = int_to_ptr.vmem [resolvable:$true] %s2261
          %2264 = dma.vmem_to_hbm [thread:$0]  %s2262, 256, %s2259, %s2247
        $region76: #{tpu_custom_call.1} parent=71 // pred_fallthru
          _
      $region72: #{tpu_custom_call.1} parent=5 // pred_fallthru
        _
      %p2265 = scmp.le.s32.totalorder 2, %s22
      // Predicated region
      $region77: #{tpu_custom_call.1} parent=5 // pred_check
        %p2266 = pneg %p2265
      $region78: #{tpu_custom_call.1} parent=5 // pred_check_branch
        %2268 = sbr.rel (%p2266) target = $region80
      $region79: #{tpu_custom_call.1} parent=5 // pred_region
        %s2269 = ssub.s32 %s22, 2
        // Predicated region
        $region81: #{tpu_custom_call.1} parent=79 // pred_check
          %p2270 = pneg %p329
        $region82: #{tpu_custom_call.1} parent=79 // pred_check_branch
          %2272 = sbr.rel (%p2270) target = $region84
        $region83: #{tpu_custom_call.1} parent=79 // pred_region
          %s2273 = sand.u32 %s314, 1
          %s2274 = scalar_lea.sflag [#allocation4], %s2273
          %s2275 = sand.u32 %s314, 1
          %s2276 = smul.addr %s2275, 16
          %s2277 = scalar_lea.vmem [#allocation3], %s2276
          %2278 = dma.done %s2274, 256
        $region84: #{tpu_custom_call.1} parent=79 // pred_fallthru
          _
      $region80: #{tpu_custom_call.1} parent=5 // pred_fallthru
        _
    $region6: #{tpu_custom_call.1} parent=1 // loop_footer
      %s26 = sadd.s32 1, %s22
    $region7: #{tpu_custom_call.1} parent=1 // loop_footer_branch
      %21 = sbr.rel target = $region3
    $region8: #{tpu_custom_call.1} parent=1 // loop_exit
      _
    %2279 = vsyncpa [#allocation4], 1
    %s2280 = scalar_lea.sflag [#allocation4], 1
    %2281 = vsyncpa %s2280, 1

</llo_original>
